<compile_context>
chip_gen: v5e
topology: v5e:2x2
jax: 0.10.0
libtpu: 0.0.40
codegen_flags: <defaults>
</compile_context>

<pallas_src>
import math

import jax
import jax.numpy as jnp
from jax import lax
from jax.experimental import pallas as pl
from jax.experimental.pallas import tpu as pltpu

# ---------------- synthetic "bert-base-chinese"-style config (small) --------
VOCAB = 100
TYPE_VOCAB = 2
MAX_POS = 16
HIDDEN = 32
HEADS = 2
HEAD_DIM = HIDDEN // HEADS
INTER = 64
LAYERS = 2
NUM_CLASSES = 2
CLS_PAD = 128                      # lane-dense padded classifier width
EPS = 1e-12
_INV_SQRT2 = 1.0 / math.sqrt(2.0)
_ATTN_SCALE = 1.0 / math.sqrt(HEAD_DIM)


# ---------------------------- fused Pallas kernel ----------------------------
def _layernorm(x, g, b):
    # single-pass stats: sum and sum-of-squares are independent reductions
    inv_n = 1.0 / x.shape[-1]
    s1 = jnp.sum(x, axis=-1, keepdims=True)
    s2 = jnp.sum(x * x, axis=-1, keepdims=True)
    mu = s1 * inv_n
    var = jnp.maximum(s2 * inv_n - mu * mu, 0.0)
    return (x - mu) * lax.rsqrt(var + EPS) * g + b


def _gelu(x):
    # exact erf-GELU (matches torch.nn.functional.gelu default / BERT)
    return 0.5 * x * (1.0 + lax.erf(x * _INV_SQRT2))


def _bert_kernel(emb_ref, mask_ref, eg_ref, eb_ref,
                 wq_ref, bq_ref, wk_ref, bk_ref, wv_ref, bv_ref,
                 wo_ref, bo_ref, g1_ref, b1_ref,
                 wi_ref, bi_ref, wo2_ref, bo2_ref, g2_ref, b2_ref,
                 cw_ref, cb_ref, out_ref):
    # All B*S tokens as one (T, HIDDEN) slab; attention masking is done with a
    # block-diagonal (T, T) additive bias, so no per-batch loop is needed.
    x = _layernorm(emb_ref[...], eg_ref[...], eb_ref[...])      # f32 (T, H)
    mask = mask_ref[...]                                         # f32 (T, T)

    for l in range(LAYERS):                    # static unroll, static indices
        xb = x.astype(jnp.bfloat16)
        attn_acc = jnp.zeros_like(x)

        for h in range(HEADS):
            lh = l * HEADS + h
            # per-head projections (pre-split weights -> no lane slicing)
            q = jnp.dot(xb, wq_ref[lh],
                        preferred_element_type=jnp.float32) + bq_ref[lh]
            k = jnp.dot(xb, wk_ref[lh],
                        preferred_element_type=jnp.float32) + bk_ref[lh]
            v = jnp.dot(xb, wv_ref[lh],
                        preferred_element_type=jnp.float32) + bv_ref[lh]

            s = lax.dot_general(q.astype(jnp.bfloat16), k.astype(jnp.bfloat16),
                                (((1,), (1,)), ((), ())),
                                preferred_element_type=jnp.float32)
            s = s * _ATTN_SCALE + mask
            # no max-subtraction: scores are small and mask bias is -1e4
            # (finite), so exp cannot overflow in f32.
            p = jnp.exp(s)
            p = p * pl.reciprocal(jnp.sum(p, axis=-1, keepdims=True),
                                  approx=True)

            ctx = jnp.dot(p.astype(jnp.bfloat16), v.astype(jnp.bfloat16),
                          preferred_element_type=jnp.float32)
            # fold the head concat into the output projection by accumulation
            attn_acc = attn_acc + jnp.dot(ctx.astype(jnp.bfloat16), wo_ref[lh],
                                          preferred_element_type=jnp.float32)

        x = _layernorm(attn_acc + bo_ref[l] + x, g1_ref[l], b1_ref[l])

        # --- feed-forward (GELU) + residual LayerNorm ---
        hmid = jnp.dot(x.astype(jnp.bfloat16), wi_ref[l],
                       preferred_element_type=jnp.float32) + bi_ref[l]
        hmid = _gelu(hmid)
        ffn = jnp.dot(hmid.astype(jnp.bfloat16), wo2_ref[l],
                      preferred_element_type=jnp.float32) + bo2_ref[l]
        x = _layernorm(ffn + x, g2_ref[l], b2_ref[l])

    # --- token classifier, padded to 128 lanes for unmasked lane-dense stores
    logits = jnp.dot(x.astype(jnp.bfloat16), cw_ref[...],
                     preferred_element_type=jnp.float32) + cb_ref[...]
    out_ref[...] = logits.astype(out_ref.dtype)


# ---------------------------- parameters -------------------------------------
def _init(key, shape, scale=0.02):
    return scale * jax.random.normal(key, shape, dtype=jnp.float32)


def init_params(key):
    keys = iter(jax.random.split(key, 8 + LAYERS * 12))
    p = {
        "word_emb": _init(next(keys), (VOCAB, HIDDEN)),
        "pos_emb": _init(next(keys), (MAX_POS, HIDDEN)),
        "type_emb": _init(next(keys), (TYPE_VOCAB, HIDDEN)),
        "emb_ln_g": jnp.ones((HIDDEN,), jnp.float32),
        "emb_ln_b": jnp.zeros((HIDDEN,), jnp.float32),
        "cls_w": _init(next(keys), (HIDDEN, NUM_CLASSES)),
        "cls_b": jnp.zeros((NUM_CLASSES,), jnp.float32),
        "layers": [],
    }
    for _ in range(LAYERS):
        lp = {
            "wq": _init(next(keys), (HIDDEN, HIDDEN)),
            "bq": jnp.zeros((HIDDEN,), jnp.float32),
            "wk": _init(next(keys), (HIDDEN, HIDDEN)),
            "bk": jnp.zeros((HIDDEN,), jnp.float32),
            "wv": _init(next(keys), (HIDDEN, HIDDEN)),
            "bv": jnp.zeros((HIDDEN,), jnp.float32),
            "wo": _init(next(keys), (HIDDEN, HIDDEN)),
            "bo": jnp.zeros((HIDDEN,), jnp.float32),
            "ln1_g": jnp.ones((HIDDEN,), jnp.float32),
            "ln1_b": jnp.zeros((HIDDEN,), jnp.float32),
            "wi": _init(next(keys), (HIDDEN, INTER)),
            "bi": jnp.zeros((INTER,), jnp.float32),
            "wo2": _init(next(keys), (INTER, HIDDEN)),
            "bo2": jnp.zeros((HIDDEN,), jnp.float32),
            "ln2_g": jnp.ones((HIDDEN,), jnp.float32),
            "ln2_b": jnp.zeros((HIDDEN,), jnp.float32),
        }
        p["layers"].append(lp)
    return p


def prepare_packed_params(params):
    """One-time weight packing (head split, bf16 cast, classifier lane-pad).

    Hoisted out of the jitted forward so real-size weights are not re-packed /
    re-written to HBM on every call.
    """
    Ls = params["layers"]

    def split_heads_in(w):           # (H, H) -> (HEADS, H, HEAD_DIM)
        return w.reshape(HIDDEN, HEADS, HEAD_DIM).transpose(1, 0, 2)

    wq = jnp.concatenate([split_heads_in(lp["wq"]) for lp in Ls]
                         ).astype(jnp.bfloat16)            # (L*HEADS, H, HD)
    wk = jnp.concatenate([split_heads_in(lp["wk"]) for lp in Ls]
                         ).astype(jnp.bfloat16)
    wv = jnp.concatenate([split_heads_in(lp["wv"]) for lp in Ls]
                         ).astype(jnp.bfloat16)
    bq = jnp.concatenate([lp["bq"].reshape(HEADS, 1, HEAD_DIM) for lp in Ls])
    bk = jnp.concatenate([lp["bk"].reshape(HEADS, 1, HEAD_DIM) for lp in Ls])
    bv = jnp.concatenate([lp["bv"].reshape(HEADS, 1, HEAD_DIM) for lp in Ls])
    # output projection split head-major along its input rows
    wo = jnp.concatenate([lp["wo"].reshape(HEADS, HEAD_DIM, HIDDEN)
                          for lp in Ls]).astype(jnp.bfloat16)  # (L*HEADS, HD, H)

    packed = {
        "word_emb": params["word_emb"],
        "pos_emb": params["pos_emb"],
        "type_emb": params["type_emb"],
        "eg": params["emb_ln_g"][None, :],
        "eb": params["emb_ln_b"][None, :],
        "wq": wq, "bq": bq, "wk": wk, "bk": bk, "wv": wv, "bv": bv, "wo": wo,
        "bo": jnp.stack([lp["bo"][None, :] for lp in Ls]),
        "g1": jnp.stack([lp["ln1_g"][None, :] for lp in Ls]),
        "b1": jnp.stack([lp["ln1_b"][None, :] for lp in Ls]),
        "wi": jnp.stack([lp["wi"] for lp in Ls]).astype(jnp.bfloat16),
        "bi": jnp.stack([lp["bi"][None, :] for lp in Ls]),
        "wo2": jnp.stack([lp["wo2"] for lp in Ls]).astype(jnp.bfloat16),
        "bo2": jnp.stack([lp["bo2"][None, :] for lp in Ls]),
        "g2": jnp.stack([lp["ln2_g"][None, :] for lp in Ls]),
        "b2": jnp.stack([lp["ln2_b"][None, :] for lp in Ls]),
    }
    cw = jnp.zeros((HIDDEN, CLS_PAD), jnp.float32)
    cw = cw.at[:, :NUM_CLASSES].set(params["cls_w"])
    cb = jnp.zeros((1, CLS_PAD), jnp.float32)
    cb = cb.at[:, :NUM_CLASSES].set(params["cls_b"][None, :])
    packed["cw"] = cw.astype(jnp.bfloat16)
    packed["cb"] = cb
    return packed


# ---------------------------- forward pass -----------------------------------
def bert_segmenter_forward(packed, input_ids, attention_mask=None,
                           token_type_ids=None):
    B, S = input_ids.shape
    T = B * S
    if attention_mask is None:
        attention_mask = jnp.ones((B, S), jnp.float32)
    if token_type_ids is None:
        token_type_ids = jnp.zeros((B, S), jnp.int32)

    # --- embeddings (gather is glue; everything else is one fused kernel) ---
    pos_ids = jnp.arange(S, dtype=jnp.int32)
    emb = (jnp.take(packed["word_emb"], input_ids, axis=0)
           + jnp.take(packed["pos_emb"], pos_ids, axis=0)[None, :, :]
           + jnp.take(packed["type_emb"], token_type_ids, axis=0))  # (B, S, H)
    emb = emb.reshape(T, HIDDEN)

    # block-diagonal additive mask bias over the flattened (B*S) token axis:
    # cross-batch and padded keys get -10000 (BERT-style), in-batch keys get 0.
    am = attention_mask.astype(jnp.float32)                       # (B, S)
    same_batch = jnp.eye(B, dtype=jnp.float32)                    # (B, B)
    keep = same_batch[:, None, :, None] * am[None, None, :, :]    # (B,1,B,S)
    keep = jnp.broadcast_to(keep, (B, S, B, S)).reshape(T, T)
    mask_bias = (1.0 - keep) * -10000.0

    args = [emb, mask_bias, packed["eg"], packed["eb"],
            packed["wq"], packed["bq"], packed["wk"], packed["bk"],
            packed["wv"], packed["bv"], packed["wo"], packed["bo"],
            packed["g1"], packed["b1"], packed["wi"], packed["bi"],
            packed["wo2"], packed["bo2"], packed["g2"], packed["b2"],
            packed["cw"], packed["cb"]]

    def full_spec(a):
        nd = a.ndim
        return pl.BlockSpec(a.shape, lambda i, _nd=nd: (0,) * _nd)

    out = pl.pallas_call(
        _bert_kernel,
        out_shape=jax.ShapeDtypeStruct((T, CLS_PAD), jnp.float32),
        grid=(1,),                                  # single invocation
        in_specs=[full_spec(a) for a in args],
        out_specs=pl.BlockSpec((T, CLS_PAD), lambda i: (0, 0)),
        compiler_params=pltpu.CompilerParams(
            dimension_semantics=("arbitrary",)),
    )(*args)

    return out[:, :NUM_CLASSES].reshape(B, S, NUM_CLASSES)


# ---------------------------- main --------------------------------------------
if __name__ == "__main__":
    key = jax.random.PRNGKey(0)
    params = init_params(key)
    packed = prepare_packed_params(params)          # one-time weight packing

    B, S = 2, 8
    ids_key = jax.random.fold_in(key, 1234)
    input_ids = jax.random.randint(ids_key, (B, S), 0, VOCAB, dtype=jnp.int32)
    attention_mask = jnp.ones((B, S), jnp.float32)
    token_type_ids = jnp.zeros((B, S), jnp.int32)

    fwd = jax.jit(bert_segmenter_forward)
    logits = fwd(packed, input_ids, attention_mask, token_type_ids)
    jax.block_until_ready(logits)
    assert logits.shape == (B, S, NUM_CLASSES)
    assert bool(jnp.all(jnp.isfinite(logits)))
    print("KERNEL_OK")
</pallas_src>

<mosaic_0001>
module attributes {stable_mosaic.version = 11 : i64} {
  func.func @_bert_kernel(%arg0: i32, %arg1: memref<16x32xf32, #tpu.memory_space<vmem>>, %arg2: memref<16x16xf32, #tpu.memory_space<vmem>>, %arg3: memref<1x32xf32, #tpu.memory_space<vmem>>, %arg4: memref<1x32xf32, #tpu.memory_space<vmem>>, %arg5: memref<4x32x16xbf16, #tpu.memory_space<vmem>>, %arg6: memref<4x1x16xf32, #tpu.memory_space<vmem>>, %arg7: memref<4x32x16xbf16, #tpu.memory_space<vmem>>, %arg8: memref<4x1x16xf32, #tpu.memory_space<vmem>>, %arg9: memref<4x32x16xbf16, #tpu.memory_space<vmem>>, %arg10: memref<4x1x16xf32, #tpu.memory_space<vmem>>, %arg11: memref<4x16x32xbf16, #tpu.memory_space<vmem>>, %arg12: memref<2x1x32xf32, #tpu.memory_space<vmem>>, %arg13: memref<2x1x32xf32, #tpu.memory_space<vmem>>, %arg14: memref<2x1x32xf32, #tpu.memory_space<vmem>>, %arg15: memref<2x32x64xbf16, #tpu.memory_space<vmem>>, %arg16: memref<2x1x64xf32, #tpu.memory_space<vmem>>, %arg17: memref<2x64x32xbf16, #tpu.memory_space<vmem>>, %arg18: memref<2x1x32xf32, #tpu.memory_space<vmem>>, %arg19: memref<2x1x32xf32, #tpu.memory_space<vmem>>, %arg20: memref<2x1x32xf32, #tpu.memory_space<vmem>>, %arg21: memref<32x128xbf16, #tpu.memory_space<vmem>>, %arg22: memref<1x128xf32, #tpu.memory_space<vmem>>, %arg23: memref<16x128xf32, #tpu.memory_space<vmem>>) attributes {dimension_semantics = [#tpu.dimension_semantics<arbitrary>], iteration_bounds = array<i64: 1>, scalar_prefetch = 0 : i64, scratch_operands = 0 : i64, tpu.core_type = #tpu.core_type<tc>, window_params = [{pipeline_mode = #tpu.pipeline_mode<synchronous>, transform_indices = @transform_0, window_bounds = array<i64: 16, 32>}, {pipeline_mode = #tpu.pipeline_mode<synchronous>, transform_indices = @transform_1, window_bounds = array<i64: 16, 16>}, {pipeline_mode = #tpu.pipeline_mode<synchronous>, transform_indices = @transform_2, window_bounds = array<i64: 1, 32>}, {pipeline_mode = #tpu.pipeline_mode<synchronous>, transform_indices = @transform_3, window_bounds = array<i64: 1, 32>}, {pipeline_mode = #tpu.pipeline_mode<synchronous>, transform_indices = @transform_4, window_bounds = array<i64: 4, 32, 16>}, {pipeline_mode = #tpu.pipeline_mode<synchronous>, transform_indices = @transform_5, window_bounds = array<i64: 4, 1, 16>}, {pipeline_mode = #tpu.pipeline_mode<synchronous>, transform_indices = @transform_6, window_bounds = array<i64: 4, 32, 16>}, {pipeline_mode = #tpu.pipeline_mode<synchronous>, transform_indices = @transform_7, window_bounds = array<i64: 4, 1, 16>}, {pipeline_mode = #tpu.pipeline_mode<synchronous>, transform_indices = @transform_8, window_bounds = array<i64: 4, 32, 16>}, {pipeline_mode = #tpu.pipeline_mode<synchronous>, transform_indices = @transform_9, window_bounds = array<i64: 4, 1, 16>}, {pipeline_mode = #tpu.pipeline_mode<synchronous>, transform_indices = @transform_10, window_bounds = array<i64: 4, 16, 32>}, {pipeline_mode = #tpu.pipeline_mode<synchronous>, transform_indices = @transform_11, window_bounds = array<i64: 2, 1, 32>}, {pipeline_mode = #tpu.pipeline_mode<synchronous>, transform_indices = @transform_12, window_bounds = array<i64: 2, 1, 32>}, {pipeline_mode = #tpu.pipeline_mode<synchronous>, transform_indices = @transform_13, window_bounds = array<i64: 2, 1, 32>}, {pipeline_mode = #tpu.pipeline_mode<synchronous>, transform_indices = @transform_14, window_bounds = array<i64: 2, 32, 64>}, {pipeline_mode = #tpu.pipeline_mode<synchronous>, transform_indices = @transform_15, window_bounds = array<i64: 2, 1, 64>}, {pipeline_mode = #tpu.pipeline_mode<synchronous>, transform_indices = @transform_16, window_bounds = array<i64: 2, 64, 32>}, {pipeline_mode = #tpu.pipeline_mode<synchronous>, transform_indices = @transform_17, window_bounds = array<i64: 2, 1, 32>}, {pipeline_mode = #tpu.pipeline_mode<synchronous>, transform_indices = @transform_18, window_bounds = array<i64: 2, 1, 32>}, {pipeline_mode = #tpu.pipeline_mode<synchronous>, transform_indices = @transform_19, window_bounds = array<i64: 2, 1, 32>}, {pipeline_mode = #tpu.pipeline_mode<synchronous>, transform_indices = @transform_20, window_bounds = array<i64: 32, 128>}, {pipeline_mode = #tpu.pipeline_mode<synchronous>, transform_indices = @transform_21, window_bounds = array<i64: 1, 128>}, {pipeline_mode = #tpu.pipeline_mode<synchronous>, transform_indices = @transform_22, window_bounds = array<i64: 16, 128>}]} {
    %c0 = arith.constant 0 : index
    %c0_0 = arith.constant 0 : index
    %0 = vector.load %arg1[%c0, %c0_0] : memref<16x32xf32, #tpu.memory_space<vmem>>, vector<16x32xf32>
    %c0_1 = arith.constant 0 : index
    %c0_2 = arith.constant 0 : index
    %1 = vector.load %arg3[%c0_1, %c0_2] : memref<1x32xf32, #tpu.memory_space<vmem>>, vector<1x32xf32>
    %c0_3 = arith.constant 0 : index
    %c0_4 = arith.constant 0 : index
    %2 = vector.load %arg4[%c0_3, %c0_4] : memref<1x32xf32, #tpu.memory_space<vmem>>, vector<1x32xf32>
    %cst = arith.constant dense<0.000000e+00> : vector<16xf32>
    %3 = vector.multi_reduction <add>, %0, %cst [1] : vector<16x32xf32> to vector<16xf32>
    %4 = vector.shape_cast %3 : vector<16xf32> to vector<16x1xf32>
    %5 = arith.mulf %0, %0 : vector<16x32xf32>
    %cst_5 = arith.constant dense<0.000000e+00> : vector<16xf32>
    %6 = vector.multi_reduction <add>, %5, %cst_5 [1] : vector<16x32xf32> to vector<16xf32>
    %7 = vector.shape_cast %6 : vector<16xf32> to vector<16x1xf32>
    %cst_6 = arith.constant 3.125000e-02 : f32
    %8 = vector.broadcast %cst_6 : f32 to vector<16x1xf32>
    %9 = arith.mulf %4, %8 : vector<16x1xf32>
    %cst_7 = arith.constant 3.125000e-02 : f32
    %10 = vector.broadcast %cst_7 : f32 to vector<16x1xf32>
    %11 = arith.mulf %7, %10 : vector<16x1xf32>
    %12 = arith.mulf %9, %9 : vector<16x1xf32>
    %13 = arith.subf %11, %12 : vector<16x1xf32>
    %cst_8 = arith.constant 0.000000e+00 : f32
    %14 = vector.broadcast %cst_8 : f32 to vector<16x1xf32>
    %15 = arith.maximumf %13, %14 : vector<16x1xf32>
    %16 = vector.broadcast %9 : vector<16x1xf32> to vector<16x32xf32>
    %17 = arith.subf %0, %16 : vector<16x32xf32>
    %cst_9 = arith.constant 9.99999996E-13 : f32
    %18 = vector.broadcast %cst_9 : f32 to vector<16x1xf32>
    %19 = arith.addf %15, %18 : vector<16x1xf32>
    %20 = math.rsqrt %19 : vector<16x1xf32>
    %21 = vector.broadcast %20 : vector<16x1xf32> to vector<16x32xf32>
    %22 = arith.mulf %17, %21 : vector<16x32xf32>
    %23 = vector.broadcast %1 : vector<1x32xf32> to vector<16x32xf32>
    %24 = arith.mulf %22, %23 : vector<16x32xf32>
    %25 = vector.broadcast %2 : vector<1x32xf32> to vector<16x32xf32>
    %26 = arith.addf %24, %25 : vector<16x32xf32>
    %c0_10 = arith.constant 0 : index
    %c0_11 = arith.constant 0 : index
    %27 = vector.load %arg2[%c0_10, %c0_11] : memref<16x16xf32, #tpu.memory_space<vmem>>, vector<16x16xf32>
    %28 = arith.truncf %26 : vector<16x32xf32> to vector<16x32xbf16>
    %cst_12 = arith.constant 0.000000e+00 : f32
    %29 = vector.broadcast %cst_12 : f32 to vector<16x32xf32>
    %c0_13 = arith.constant 0 : index
    %c0_14 = arith.constant 0 : index
    %c0_15 = arith.constant 0 : index
    %30 = vector.load %arg5[%c0_13, %c0_14, %c0_15] : memref<4x32x16xbf16, #tpu.memory_space<vmem>>, vector<1x32x16xbf16>
    %31 = vector.shape_cast %30 : vector<1x32x16xbf16> to vector<32x16xbf16>
    %cst_16 = arith.constant dense<0.000000e+00> : vector<16x16xf32>
    %32 = tpu.matmul %28, %31, %cst_16 {dimension_numbers = #tpu.dot_dimension_numbers<[1], [0], [0], [1], [0, 0, 1, 1], [], []>} : vector<16x32xbf16>, vector<32x16xbf16>, vector<16x16xf32> -> vector<16x16xf32>
    %c0_17 = arith.constant 0 : index
    %c0_18 = arith.constant 0 : index
    %c0_19 = arith.constant 0 : index
    %33 = vector.load %arg6[%c0_17, %c0_18, %c0_19] : memref<4x1x16xf32, #tpu.memory_space<vmem>>, vector<1x1x16xf32>
    %34 = vector.shape_cast %33 : vector<1x1x16xf32> to vector<1x16xf32>
    %35 = vector.broadcast %34 : vector<1x16xf32> to vector<16x16xf32>
    %36 = arith.addf %32, %35 : vector<16x16xf32>
    %c0_20 = arith.constant 0 : index
    %c0_21 = arith.constant 0 : index
    %c0_22 = arith.constant 0 : index
    %37 = vector.load %arg7[%c0_20, %c0_21, %c0_22] : memref<4x32x16xbf16, #tpu.memory_space<vmem>>, vector<1x32x16xbf16>
    %38 = vector.shape_cast %37 : vector<1x32x16xbf16> to vector<32x16xbf16>
    %cst_23 = arith.constant dense<0.000000e+00> : vector<16x16xf32>
    %39 = tpu.matmul %28, %38, %cst_23 {dimension_numbers = #tpu.dot_dimension_numbers<[1], [0], [0], [1], [0, 0, 1, 1], [], []>} : vector<16x32xbf16>, vector<32x16xbf16>, vector<16x16xf32> -> vector<16x16xf32>
    %c0_24 = arith.constant 0 : index
    %c0_25 = arith.constant 0 : index
    %c0_26 = arith.constant 0 : index
    %40 = vector.load %arg8[%c0_24, %c0_25, %c0_26] : memref<4x1x16xf32, #tpu.memory_space<vmem>>, vector<1x1x16xf32>
    %41 = vector.shape_cast %40 : vector<1x1x16xf32> to vector<1x16xf32>
    %42 = vector.broadcast %41 : vector<1x16xf32> to vector<16x16xf32>
    %43 = arith.addf %39, %42 : vector<16x16xf32>
    %c0_27 = arith.constant 0 : index
    %c0_28 = arith.constant 0 : index
    %c0_29 = arith.constant 0 : index
    %44 = vector.load %arg9[%c0_27, %c0_28, %c0_29] : memref<4x32x16xbf16, #tpu.memory_space<vmem>>, vector<1x32x16xbf16>
    %45 = vector.shape_cast %44 : vector<1x32x16xbf16> to vector<32x16xbf16>
    %cst_30 = arith.constant dense<0.000000e+00> : vector<16x16xf32>
    %46 = tpu.matmul %28, %45, %cst_30 {dimension_numbers = #tpu.dot_dimension_numbers<[1], [0], [0], [1], [0, 0, 1, 1], [], []>} : vector<16x32xbf16>, vector<32x16xbf16>, vector<16x16xf32> -> vector<16x16xf32>
    %c0_31 = arith.constant 0 : index
    %c0_32 = arith.constant 0 : index
    %c0_33 = arith.constant 0 : index
    %47 = vector.load %arg10[%c0_31, %c0_32, %c0_33] : memref<4x1x16xf32, #tpu.memory_space<vmem>>, vector<1x1x16xf32>
    %48 = vector.shape_cast %47 : vector<1x1x16xf32> to vector<1x16xf32>
    %49 = vector.broadcast %48 : vector<1x16xf32> to vector<16x16xf32>
    %50 = arith.addf %46, %49 : vector<16x16xf32>
    %51 = arith.truncf %36 : vector<16x16xf32> to vector<16x16xbf16>
    %52 = arith.truncf %43 : vector<16x16xf32> to vector<16x16xbf16>
    %cst_34 = arith.constant dense<0.000000e+00> : vector<16x16xf32>
    %53 = tpu.matmul %51, %52, %cst_34 {dimension_numbers = #tpu.dot_dimension_numbers<[1], [1], [0], [0], [0, 0, 1, 0], [], []>} : vector<16x16xbf16>, vector<16x16xbf16>, vector<16x16xf32> -> vector<16x16xf32>
    %cst_35 = arith.constant 2.500000e-01 : f32
    %54 = vector.broadcast %cst_35 : f32 to vector<16x16xf32>
    %55 = arith.mulf %53, %54 : vector<16x16xf32>
    %56 = arith.addf %55, %27 : vector<16x16xf32>
    %57 = math.exp %56 : vector<16x16xf32>
    %cst_36 = arith.constant dense<0.000000e+00> : vector<16xf32>
    %58 = vector.multi_reduction <add>, %57, %cst_36 [1] : vector<16x16xf32> to vector<16xf32>
    %59 = vector.shape_cast %58 : vector<16xf32> to vector<16x1xf32>
    %60 = tpu.reciprocal %59 {approx = true} : vector<16x1xf32> -> vector<16x1xf32>
    %61 = vector.broadcast %60 : vector<16x1xf32> to vector<16x16xf32>
    %62 = arith.mulf %57, %61 : vector<16x16xf32>
    %63 = arith.truncf %62 : vector<16x16xf32> to vector<16x16xbf16>
    %64 = arith.truncf %50 : vector<16x16xf32> to vector<16x16xbf16>
    %cst_37 = arith.constant dense<0.000000e+00> : vector<16x16xf32>
    %65 = tpu.matmul %63, %64, %cst_37 {dimension_numbers = #tpu.dot_dimension_numbers<[1], [0], [0], [1], [0, 0, 1, 1], [], []>} : vector<16x16xbf16>, vector<16x16xbf16>, vector<16x16xf32> -> vector<16x16xf32>
    %66 = arith.truncf %65 : vector<16x16xf32> to vector<16x16xbf16>
    %c0_38 = arith.constant 0 : index
    %c0_39 = arith.constant 0 : index
    %c0_40 = arith.constant 0 : index
    %67 = vector.load %arg11[%c0_38, %c0_39, %c0_40] : memref<4x16x32xbf16, #tpu.memory_space<vmem>>, vector<1x16x32xbf16>
    %68 = vector.shape_cast %67 : vector<1x16x32xbf16> to vector<16x32xbf16>
    %cst_41 = arith.constant dense<0.000000e+00> : vector<16x32xf32>
    %69 = tpu.matmul %66, %68, %cst_41 {dimension_numbers = #tpu.dot_dimension_numbers<[1], [0], [0], [1], [0, 0, 1, 1], [], []>} : vector<16x16xbf16>, vector<16x32xbf16>, vector<16x32xf32> -> vector<16x32xf32>
    %70 = arith.addf %29, %69 : vector<16x32xf32>
    %c1 = arith.constant 1 : index
    %c0_42 = arith.constant 0 : index
    %c0_43 = arith.constant 0 : index
    %71 = vector.load %arg5[%c1, %c0_42, %c0_43] : memref<4x32x16xbf16, #tpu.memory_space<vmem>>, vector<1x32x16xbf16>
    %72 = vector.shape_cast %71 : vector<1x32x16xbf16> to vector<32x16xbf16>
    %cst_44 = arith.constant dense<0.000000e+00> : vector<16x16xf32>
    %73 = tpu.matmul %28, %72, %cst_44 {dimension_numbers = #tpu.dot_dimension_numbers<[1], [0], [0], [1], [0, 0, 1, 1], [], []>} : vector<16x32xbf16>, vector<32x16xbf16>, vector<16x16xf32> -> vector<16x16xf32>
    %c1_45 = arith.constant 1 : index
    %c0_46 = arith.constant 0 : index
    %c0_47 = arith.constant 0 : index
    %74 = vector.load %arg6[%c1_45, %c0_46, %c0_47] : memref<4x1x16xf32, #tpu.memory_space<vmem>>, vector<1x1x16xf32>
    %75 = vector.shape_cast %74 : vector<1x1x16xf32> to vector<1x16xf32>
    %76 = vector.broadcast %75 : vector<1x16xf32> to vector<16x16xf32>
    %77 = arith.addf %73, %76 : vector<16x16xf32>
    %c1_48 = arith.constant 1 : index
    %c0_49 = arith.constant 0 : index
    %c0_50 = arith.constant 0 : index
    %78 = vector.load %arg7[%c1_48, %c0_49, %c0_50] : memref<4x32x16xbf16, #tpu.memory_space<vmem>>, vector<1x32x16xbf16>
    %79 = vector.shape_cast %78 : vector<1x32x16xbf16> to vector<32x16xbf16>
    %cst_51 = arith.constant dense<0.000000e+00> : vector<16x16xf32>
    %80 = tpu.matmul %28, %79, %cst_51 {dimension_numbers = #tpu.dot_dimension_numbers<[1], [0], [0], [1], [0, 0, 1, 1], [], []>} : vector<16x32xbf16>, vector<32x16xbf16>, vector<16x16xf32> -> vector<16x16xf32>
    %c1_52 = arith.constant 1 : index
    %c0_53 = arith.constant 0 : index
    %c0_54 = arith.constant 0 : index
    %81 = vector.load %arg8[%c1_52, %c0_53, %c0_54] : memref<4x1x16xf32, #tpu.memory_space<vmem>>, vector<1x1x16xf32>
    %82 = vector.shape_cast %81 : vector<1x1x16xf32> to vector<1x16xf32>
    %83 = vector.broadcast %82 : vector<1x16xf32> to vector<16x16xf32>
    %84 = arith.addf %80, %83 : vector<16x16xf32>
    %c1_55 = arith.constant 1 : index
    %c0_56 = arith.constant 0 : index
    %c0_57 = arith.constant 0 : index
    %85 = vector.load %arg9[%c1_55, %c0_56, %c0_57] : memref<4x32x16xbf16, #tpu.memory_space<vmem>>, vector<1x32x16xbf16>
    %86 = vector.shape_cast %85 : vector<1x32x16xbf16> to vector<32x16xbf16>
    %cst_58 = arith.constant dense<0.000000e+00> : vector<16x16xf32>
    %87 = tpu.matmul %28, %86, %cst_58 {dimension_numbers = #tpu.dot_dimension_numbers<[1], [0], [0], [1], [0, 0, 1, 1], [], []>} : vector<16x32xbf16>, vector<32x16xbf16>, vector<16x16xf32> -> vector<16x16xf32>
    %c1_59 = arith.constant 1 : index
    %c0_60 = arith.constant 0 : index
    %c0_61 = arith.constant 0 : index
    %88 = vector.load %arg10[%c1_59, %c0_60, %c0_61] : memref<4x1x16xf32, #tpu.memory_space<vmem>>, vector<1x1x16xf32>
    %89 = vector.shape_cast %88 : vector<1x1x16xf32> to vector<1x16xf32>
    %90 = vector.broadcast %89 : vector<1x16xf32> to vector<16x16xf32>
    %91 = arith.addf %87, %90 : vector<16x16xf32>
    %92 = arith.truncf %77 : vector<16x16xf32> to vector<16x16xbf16>
    %93 = arith.truncf %84 : vector<16x16xf32> to vector<16x16xbf16>
    %cst_62 = arith.constant dense<0.000000e+00> : vector<16x16xf32>
    %94 = tpu.matmul %92, %93, %cst_62 {dimension_numbers = #tpu.dot_dimension_numbers<[1], [1], [0], [0], [0, 0, 1, 0], [], []>} : vector<16x16xbf16>, vector<16x16xbf16>, vector<16x16xf32> -> vector<16x16xf32>
    %cst_63 = arith.constant 2.500000e-01 : f32
    %95 = vector.broadcast %cst_63 : f32 to vector<16x16xf32>
    %96 = arith.mulf %94, %95 : vector<16x16xf32>
    %97 = arith.addf %96, %27 : vector<16x16xf32>
    %98 = math.exp %97 : vector<16x16xf32>
    %cst_64 = arith.constant dense<0.000000e+00> : vector<16xf32>
    %99 = vector.multi_reduction <add>, %98, %cst_64 [1] : vector<16x16xf32> to vector<16xf32>
    %100 = vector.shape_cast %99 : vector<16xf32> to vector<16x1xf32>
    %101 = tpu.reciprocal %100 {approx = true} : vector<16x1xf32> -> vector<16x1xf32>
    %102 = vector.broadcast %101 : vector<16x1xf32> to vector<16x16xf32>
    %103 = arith.mulf %98, %102 : vector<16x16xf32>
    %104 = arith.truncf %103 : vector<16x16xf32> to vector<16x16xbf16>
    %105 = arith.truncf %91 : vector<16x16xf32> to vector<16x16xbf16>
    %cst_65 = arith.constant dense<0.000000e+00> : vector<16x16xf32>
    %106 = tpu.matmul %104, %105, %cst_65 {dimension_numbers = #tpu.dot_dimension_numbers<[1], [0], [0], [1], [0, 0, 1, 1], [], []>} : vector<16x16xbf16>, vector<16x16xbf16>, vector<16x16xf32> -> vector<16x16xf32>
    %107 = arith.truncf %106 : vector<16x16xf32> to vector<16x16xbf16>
    %c1_66 = arith.constant 1 : index
    %c0_67 = arith.constant 0 : index
    %c0_68 = arith.constant 0 : index
    %108 = vector.load %arg11[%c1_66, %c0_67, %c0_68] : memref<4x16x32xbf16, #tpu.memory_space<vmem>>, vector<1x16x32xbf16>
    %109 = vector.shape_cast %108 : vector<1x16x32xbf16> to vector<16x32xbf16>
    %cst_69 = arith.constant dense<0.000000e+00> : vector<16x32xf32>
    %110 = tpu.matmul %107, %109, %cst_69 {dimension_numbers = #tpu.dot_dimension_numbers<[1], [0], [0], [1], [0, 0, 1, 1], [], []>} : vector<16x16xbf16>, vector<16x32xbf16>, vector<16x32xf32> -> vector<16x32xf32>
    %111 = arith.addf %70, %110 : vector<16x32xf32>
    %c0_70 = arith.constant 0 : index
    %c0_71 = arith.constant 0 : index
    %c0_72 = arith.constant 0 : index
    %112 = vector.load %arg12[%c0_70, %c0_71, %c0_72] : memref<2x1x32xf32, #tpu.memory_space<vmem>>, vector<1x1x32xf32>
    %113 = vector.shape_cast %112 : vector<1x1x32xf32> to vector<1x32xf32>
    %114 = vector.broadcast %113 : vector<1x32xf32> to vector<16x32xf32>
    %115 = arith.addf %111, %114 : vector<16x32xf32>
    %116 = arith.addf %115, %26 : vector<16x32xf32>
    %c0_73 = arith.constant 0 : index
    %c0_74 = arith.constant 0 : index
    %c0_75 = arith.constant 0 : index
    %117 = vector.load %arg13[%c0_73, %c0_74, %c0_75] : memref<2x1x32xf32, #tpu.memory_space<vmem>>, vector<1x1x32xf32>
    %118 = vector.shape_cast %117 : vector<1x1x32xf32> to vector<1x32xf32>
    %c0_76 = arith.constant 0 : index
    %c0_77 = arith.constant 0 : index
    %c0_78 = arith.constant 0 : index
    %119 = vector.load %arg14[%c0_76, %c0_77, %c0_78] : memref<2x1x32xf32, #tpu.memory_space<vmem>>, vector<1x1x32xf32>
    %120 = vector.shape_cast %119 : vector<1x1x32xf32> to vector<1x32xf32>
    %cst_79 = arith.constant dense<0.000000e+00> : vector<16xf32>
    %121 = vector.multi_reduction <add>, %116, %cst_79 [1] : vector<16x32xf32> to vector<16xf32>
    %122 = vector.shape_cast %121 : vector<16xf32> to vector<16x1xf32>
    %123 = arith.mulf %116, %116 : vector<16x32xf32>
    %cst_80 = arith.constant dense<0.000000e+00> : vector<16xf32>
    %124 = vector.multi_reduction <add>, %123, %cst_80 [1] : vector<16x32xf32> to vector<16xf32>
    %125 = vector.shape_cast %124 : vector<16xf32> to vector<16x1xf32>
    %cst_81 = arith.constant 3.125000e-02 : f32
    %126 = vector.broadcast %cst_81 : f32 to vector<16x1xf32>
    %127 = arith.mulf %122, %126 : vector<16x1xf32>
    %cst_82 = arith.constant 3.125000e-02 : f32
    %128 = vector.broadcast %cst_82 : f32 to vector<16x1xf32>
    %129 = arith.mulf %125, %128 : vector<16x1xf32>
    %130 = arith.mulf %127, %127 : vector<16x1xf32>
    %131 = arith.subf %129, %130 : vector<16x1xf32>
    %cst_83 = arith.constant 0.000000e+00 : f32
    %132 = vector.broadcast %cst_83 : f32 to vector<16x1xf32>
    %133 = arith.maximumf %131, %132 : vector<16x1xf32>
    %134 = vector.broadcast %127 : vector<16x1xf32> to vector<16x32xf32>
    %135 = arith.subf %116, %134 : vector<16x32xf32>
    %cst_84 = arith.constant 9.99999996E-13 : f32
    %136 = vector.broadcast %cst_84 : f32 to vector<16x1xf32>
    %137 = arith.addf %133, %136 : vector<16x1xf32>
    %138 = math.rsqrt %137 : vector<16x1xf32>
    %139 = vector.broadcast %138 : vector<16x1xf32> to vector<16x32xf32>
    %140 = arith.mulf %135, %139 : vector<16x32xf32>
    %141 = vector.broadcast %118 : vector<1x32xf32> to vector<16x32xf32>
    %142 = arith.mulf %140, %141 : vector<16x32xf32>
    %143 = vector.broadcast %120 : vector<1x32xf32> to vector<16x32xf32>
    %144 = arith.addf %142, %143 : vector<16x32xf32>
    %145 = arith.truncf %144 : vector<16x32xf32> to vector<16x32xbf16>
    %c0_85 = arith.constant 0 : index
    %c0_86 = arith.constant 0 : index
    %c0_87 = arith.constant 0 : index
    %146 = vector.load %arg15[%c0_85, %c0_86, %c0_87] : memref<2x32x64xbf16, #tpu.memory_space<vmem>>, vector<1x32x64xbf16>
    %147 = vector.shape_cast %146 : vector<1x32x64xbf16> to vector<32x64xbf16>
    %cst_88 = arith.constant dense<0.000000e+00> : vector<16x64xf32>
    %148 = tpu.matmul %145, %147, %cst_88 {dimension_numbers = #tpu.dot_dimension_numbers<[1], [0], [0], [1], [0, 0, 1, 1], [], []>} : vector<16x32xbf16>, vector<32x64xbf16>, vector<16x64xf32> -> vector<16x64xf32>
    %c0_89 = arith.constant 0 : index
    %c0_90 = arith.constant 0 : index
    %c0_91 = arith.constant 0 : index
    %149 = vector.load %arg16[%c0_89, %c0_90, %c0_91] : memref<2x1x64xf32, #tpu.memory_space<vmem>>, vector<1x1x64xf32>
    %150 = vector.shape_cast %149 : vector<1x1x64xf32> to vector<1x64xf32>
    %151 = vector.broadcast %150 : vector<1x64xf32> to vector<16x64xf32>
    %152 = arith.addf %148, %151 : vector<16x64xf32>
    %cst_92 = arith.constant 5.000000e-01 : f32
    %153 = vector.broadcast %cst_92 : f32 to vector<16x64xf32>
    %154 = arith.mulf %153, %152 : vector<16x64xf32>
    %cst_93 = arith.constant 0.707106769 : f32
    %155 = vector.broadcast %cst_93 : f32 to vector<16x64xf32>
    %156 = arith.mulf %152, %155 : vector<16x64xf32>
    %157 = math.erf %156 : vector<16x64xf32>
    %cst_94 = arith.constant 1.000000e+00 : f32
    %158 = vector.broadcast %cst_94 : f32 to vector<16x64xf32>
    %159 = arith.addf %158, %157 : vector<16x64xf32>
    %160 = arith.mulf %154, %159 : vector<16x64xf32>
    %161 = arith.truncf %160 : vector<16x64xf32> to vector<16x64xbf16>
    %c0_95 = arith.constant 0 : index
    %c0_96 = arith.constant 0 : index
    %c0_97 = arith.constant 0 : index
    %162 = vector.load %arg17[%c0_95, %c0_96, %c0_97] : memref<2x64x32xbf16, #tpu.memory_space<vmem>>, vector<1x64x32xbf16>
    %163 = vector.shape_cast %162 : vector<1x64x32xbf16> to vector<64x32xbf16>
    %cst_98 = arith.constant dense<0.000000e+00> : vector<16x32xf32>
    %164 = tpu.matmul %161, %163, %cst_98 {dimension_numbers = #tpu.dot_dimension_numbers<[1], [0], [0], [1], [0, 0, 1, 1], [], []>} : vector<16x64xbf16>, vector<64x32xbf16>, vector<16x32xf32> -> vector<16x32xf32>
    %c0_99 = arith.constant 0 : index
    %c0_100 = arith.constant 0 : index
    %c0_101 = arith.constant 0 : index
    %165 = vector.load %arg18[%c0_99, %c0_100, %c0_101] : memref<2x1x32xf32, #tpu.memory_space<vmem>>, vector<1x1x32xf32>
    %166 = vector.shape_cast %165 : vector<1x1x32xf32> to vector<1x32xf32>
    %167 = vector.broadcast %166 : vector<1x32xf32> to vector<16x32xf32>
    %168 = arith.addf %164, %167 : vector<16x32xf32>
    %169 = arith.addf %168, %144 : vector<16x32xf32>
    %c0_102 = arith.constant 0 : index
    %c0_103 = arith.constant 0 : index
    %c0_104 = arith.constant 0 : index
    %170 = vector.load %arg19[%c0_102, %c0_103, %c0_104] : memref<2x1x32xf32, #tpu.memory_space<vmem>>, vector<1x1x32xf32>
    %171 = vector.shape_cast %170 : vector<1x1x32xf32> to vector<1x32xf32>
    %c0_105 = arith.constant 0 : index
    %c0_106 = arith.constant 0 : index
    %c0_107 = arith.constant 0 : index
    %172 = vector.load %arg20[%c0_105, %c0_106, %c0_107] : memref<2x1x32xf32, #tpu.memory_space<vmem>>, vector<1x1x32xf32>
    %173 = vector.shape_cast %172 : vector<1x1x32xf32> to vector<1x32xf32>
    %cst_108 = arith.constant dense<0.000000e+00> : vector<16xf32>
    %174 = vector.multi_reduction <add>, %169, %cst_108 [1] : vector<16x32xf32> to vector<16xf32>
    %175 = vector.shape_cast %174 : vector<16xf32> to vector<16x1xf32>
    %176 = arith.mulf %169, %169 : vector<16x32xf32>
    %cst_109 = arith.constant dense<0.000000e+00> : vector<16xf32>
    %177 = vector.multi_reduction <add>, %176, %cst_109 [1] : vector<16x32xf32> to vector<16xf32>
    %178 = vector.shape_cast %177 : vector<16xf32> to vector<16x1xf32>
    %cst_110 = arith.constant 3.125000e-02 : f32
    %179 = vector.broadcast %cst_110 : f32 to vector<16x1xf32>
    %180 = arith.mulf %175, %179 : vector<16x1xf32>
    %cst_111 = arith.constant 3.125000e-02 : f32
    %181 = vector.broadcast %cst_111 : f32 to vector<16x1xf32>
    %182 = arith.mulf %178, %181 : vector<16x1xf32>
    %183 = arith.mulf %180, %180 : vector<16x1xf32>
    %184 = arith.subf %182, %183 : vector<16x1xf32>
    %cst_112 = arith.constant 0.000000e+00 : f32
    %185 = vector.broadcast %cst_112 : f32 to vector<16x1xf32>
    %186 = arith.maximumf %184, %185 : vector<16x1xf32>
    %187 = vector.broadcast %180 : vector<16x1xf32> to vector<16x32xf32>
    %188 = arith.subf %169, %187 : vector<16x32xf32>
    %cst_113 = arith.constant 9.99999996E-13 : f32
    %189 = vector.broadcast %cst_113 : f32 to vector<16x1xf32>
    %190 = arith.addf %186, %189 : vector<16x1xf32>
    %191 = math.rsqrt %190 : vector<16x1xf32>
    %192 = vector.broadcast %191 : vector<16x1xf32> to vector<16x32xf32>
    %193 = arith.mulf %188, %192 : vector<16x32xf32>
    %194 = vector.broadcast %171 : vector<1x32xf32> to vector<16x32xf32>
    %195 = arith.mulf %193, %194 : vector<16x32xf32>
    %196 = vector.broadcast %173 : vector<1x32xf32> to vector<16x32xf32>
    %197 = arith.addf %195, %196 : vector<16x32xf32>
    %198 = arith.truncf %197 : vector<16x32xf32> to vector<16x32xbf16>
    %cst_114 = arith.constant 0.000000e+00 : f32
    %199 = vector.broadcast %cst_114 : f32 to vector<16x32xf32>
    %c2 = arith.constant 2 : index
    %c0_115 = arith.constant 0 : index
    %c0_116 = arith.constant 0 : index
    %200 = vector.load %arg5[%c2, %c0_115, %c0_116] : memref<4x32x16xbf16, #tpu.memory_space<vmem>>, vector<1x32x16xbf16>
    %201 = vector.shape_cast %200 : vector<1x32x16xbf16> to vector<32x16xbf16>
    %cst_117 = arith.constant dense<0.000000e+00> : vector<16x16xf32>
    %202 = tpu.matmul %198, %201, %cst_117 {dimension_numbers = #tpu.dot_dimension_numbers<[1], [0], [0], [1], [0, 0, 1, 1], [], []>} : vector<16x32xbf16>, vector<32x16xbf16>, vector<16x16xf32> -> vector<16x16xf32>
    %c2_118 = arith.constant 2 : index
    %c0_119 = arith.constant 0 : index
    %c0_120 = arith.constant 0 : index
    %203 = vector.load %arg6[%c2_118, %c0_119, %c0_120] : memref<4x1x16xf32, #tpu.memory_space<vmem>>, vector<1x1x16xf32>
    %204 = vector.shape_cast %203 : vector<1x1x16xf32> to vector<1x16xf32>
    %205 = vector.broadcast %204 : vector<1x16xf32> to vector<16x16xf32>
    %206 = arith.addf %202, %205 : vector<16x16xf32>
    %c2_121 = arith.constant 2 : index
    %c0_122 = arith.constant 0 : index
    %c0_123 = arith.constant 0 : index
    %207 = vector.load %arg7[%c2_121, %c0_122, %c0_123] : memref<4x32x16xbf16, #tpu.memory_space<vmem>>, vector<1x32x16xbf16>
    %208 = vector.shape_cast %207 : vector<1x32x16xbf16> to vector<32x16xbf16>
    %cst_124 = arith.constant dense<0.000000e+00> : vector<16x16xf32>
    %209 = tpu.matmul %198, %208, %cst_124 {dimension_numbers = #tpu.dot_dimension_numbers<[1], [0], [0], [1], [0, 0, 1, 1], [], []>} : vector<16x32xbf16>, vector<32x16xbf16>, vector<16x16xf32> -> vector<16x16xf32>
    %c2_125 = arith.constant 2 : index
    %c0_126 = arith.constant 0 : index
    %c0_127 = arith.constant 0 : index
    %210 = vector.load %arg8[%c2_125, %c0_126, %c0_127] : memref<4x1x16xf32, #tpu.memory_space<vmem>>, vector<1x1x16xf32>
    %211 = vector.shape_cast %210 : vector<1x1x16xf32> to vector<1x16xf32>
    %212 = vector.broadcast %211 : vector<1x16xf32> to vector<16x16xf32>
    %213 = arith.addf %209, %212 : vector<16x16xf32>
    %c2_128 = arith.constant 2 : index
    %c0_129 = arith.constant 0 : index
    %c0_130 = arith.constant 0 : index
    %214 = vector.load %arg9[%c2_128, %c0_129, %c0_130] : memref<4x32x16xbf16, #tpu.memory_space<vmem>>, vector<1x32x16xbf16>
    %215 = vector.shape_cast %214 : vector<1x32x16xbf16> to vector<32x16xbf16>
    %cst_131 = arith.constant dense<0.000000e+00> : vector<16x16xf32>
    %216 = tpu.matmul %198, %215, %cst_131 {dimension_numbers = #tpu.dot_dimension_numbers<[1], [0], [0], [1], [0, 0, 1, 1], [], []>} : vector<16x32xbf16>, vector<32x16xbf16>, vector<16x16xf32> -> vector<16x16xf32>
    %c2_132 = arith.constant 2 : index
    %c0_133 = arith.constant 0 : index
    %c0_134 = arith.constant 0 : index
    %217 = vector.load %arg10[%c2_132, %c0_133, %c0_134] : memref<4x1x16xf32, #tpu.memory_space<vmem>>, vector<1x1x16xf32>
    %218 = vector.shape_cast %217 : vector<1x1x16xf32> to vector<1x16xf32>
    %219 = vector.broadcast %218 : vector<1x16xf32> to vector<16x16xf32>
    %220 = arith.addf %216, %219 : vector<16x16xf32>
    %221 = arith.truncf %206 : vector<16x16xf32> to vector<16x16xbf16>
    %222 = arith.truncf %213 : vector<16x16xf32> to vector<16x16xbf16>
    %cst_135 = arith.constant dense<0.000000e+00> : vector<16x16xf32>
    %223 = tpu.matmul %221, %222, %cst_135 {dimension_numbers = #tpu.dot_dimension_numbers<[1], [1], [0], [0], [0, 0, 1, 0], [], []>} : vector<16x16xbf16>, vector<16x16xbf16>, vector<16x16xf32> -> vector<16x16xf32>
    %cst_136 = arith.constant 2.500000e-01 : f32
    %224 = vector.broadcast %cst_136 : f32 to vector<16x16xf32>
    %225 = arith.mulf %223, %224 : vector<16x16xf32>
    %226 = arith.addf %225, %27 : vector<16x16xf32>
    %227 = math.exp %226 : vector<16x16xf32>
    %cst_137 = arith.constant dense<0.000000e+00> : vector<16xf32>
    %228 = vector.multi_reduction <add>, %227, %cst_137 [1] : vector<16x16xf32> to vector<16xf32>
    %229 = vector.shape_cast %228 : vector<16xf32> to vector<16x1xf32>
    %230 = tpu.reciprocal %229 {approx = true} : vector<16x1xf32> -> vector<16x1xf32>
    %231 = vector.broadcast %230 : vector<16x1xf32> to vector<16x16xf32>
    %232 = arith.mulf %227, %231 : vector<16x16xf32>
    %233 = arith.truncf %232 : vector<16x16xf32> to vector<16x16xbf16>
    %234 = arith.truncf %220 : vector<16x16xf32> to vector<16x16xbf16>
    %cst_138 = arith.constant dense<0.000000e+00> : vector<16x16xf32>
    %235 = tpu.matmul %233, %234, %cst_138 {dimension_numbers = #tpu.dot_dimension_numbers<[1], [0], [0], [1], [0, 0, 1, 1], [], []>} : vector<16x16xbf16>, vector<16x16xbf16>, vector<16x16xf32> -> vector<16x16xf32>
    %236 = arith.truncf %235 : vector<16x16xf32> to vector<16x16xbf16>
    %c2_139 = arith.constant 2 : index
    %c0_140 = arith.constant 0 : index
    %c0_141 = arith.constant 0 : index
    %237 = vector.load %arg11[%c2_139, %c0_140, %c0_141] : memref<4x16x32xbf16, #tpu.memory_space<vmem>>, vector<1x16x32xbf16>
    %238 = vector.shape_cast %237 : vector<1x16x32xbf16> to vector<16x32xbf16>
    %cst_142 = arith.constant dense<0.000000e+00> : vector<16x32xf32>
    %239 = tpu.matmul %236, %238, %cst_142 {dimension_numbers = #tpu.dot_dimension_numbers<[1], [0], [0], [1], [0, 0, 1, 1], [], []>} : vector<16x16xbf16>, vector<16x32xbf16>, vector<16x32xf32> -> vector<16x32xf32>
    %240 = arith.addf %199, %239 : vector<16x32xf32>
    %c3 = arith.constant 3 : index
    %c0_143 = arith.constant 0 : index
    %c0_144 = arith.constant 0 : index
    %241 = vector.load %arg5[%c3, %c0_143, %c0_144] : memref<4x32x16xbf16, #tpu.memory_space<vmem>>, vector<1x32x16xbf16>
    %242 = vector.shape_cast %241 : vector<1x32x16xbf16> to vector<32x16xbf16>
    %cst_145 = arith.constant dense<0.000000e+00> : vector<16x16xf32>
    %243 = tpu.matmul %198, %242, %cst_145 {dimension_numbers = #tpu.dot_dimension_numbers<[1], [0], [0], [1], [0, 0, 1, 1], [], []>} : vector<16x32xbf16>, vector<32x16xbf16>, vector<16x16xf32> -> vector<16x16xf32>
    %c3_146 = arith.constant 3 : index
    %c0_147 = arith.constant 0 : index
    %c0_148 = arith.constant 0 : index
    %244 = vector.load %arg6[%c3_146, %c0_147, %c0_148] : memref<4x1x16xf32, #tpu.memory_space<vmem>>, vector<1x1x16xf32>
    %245 = vector.shape_cast %244 : vector<1x1x16xf32> to vector<1x16xf32>
    %246 = vector.broadcast %245 : vector<1x16xf32> to vector<16x16xf32>
    %247 = arith.addf %243, %246 : vector<16x16xf32>
    %c3_149 = arith.constant 3 : index
    %c0_150 = arith.constant 0 : index
    %c0_151 = arith.constant 0 : index
    %248 = vector.load %arg7[%c3_149, %c0_150, %c0_151] : memref<4x32x16xbf16, #tpu.memory_space<vmem>>, vector<1x32x16xbf16>
    %249 = vector.shape_cast %248 : vector<1x32x16xbf16> to vector<32x16xbf16>
    %cst_152 = arith.constant dense<0.000000e+00> : vector<16x16xf32>
    %250 = tpu.matmul %198, %249, %cst_152 {dimension_numbers = #tpu.dot_dimension_numbers<[1], [0], [0], [1], [0, 0, 1, 1], [], []>} : vector<16x32xbf16>, vector<32x16xbf16>, vector<16x16xf32> -> vector<16x16xf32>
    %c3_153 = arith.constant 3 : index
    %c0_154 = arith.constant 0 : index
    %c0_155 = arith.constant 0 : index
    %251 = vector.load %arg8[%c3_153, %c0_154, %c0_155] : memref<4x1x16xf32, #tpu.memory_space<vmem>>, vector<1x1x16xf32>
    %252 = vector.shape_cast %251 : vector<1x1x16xf32> to vector<1x16xf32>
    %253 = vector.broadcast %252 : vector<1x16xf32> to vector<16x16xf32>
    %254 = arith.addf %250, %253 : vector<16x16xf32>
    %c3_156 = arith.constant 3 : index
    %c0_157 = arith.constant 0 : index
    %c0_158 = arith.constant 0 : index
    %255 = vector.load %arg9[%c3_156, %c0_157, %c0_158] : memref<4x32x16xbf16, #tpu.memory_space<vmem>>, vector<1x32x16xbf16>
    %256 = vector.shape_cast %255 : vector<1x32x16xbf16> to vector<32x16xbf16>
    %cst_159 = arith.constant dense<0.000000e+00> : vector<16x16xf32>
    %257 = tpu.matmul %198, %256, %cst_159 {dimension_numbers = #tpu.dot_dimension_numbers<[1], [0], [0], [1], [0, 0, 1, 1], [], []>} : vector<16x32xbf16>, vector<32x16xbf16>, vector<16x16xf32> -> vector<16x16xf32>
    %c3_160 = arith.constant 3 : index
    %c0_161 = arith.constant 0 : index
    %c0_162 = arith.constant 0 : index
    %258 = vector.load %arg10[%c3_160, %c0_161, %c0_162] : memref<4x1x16xf32, #tpu.memory_space<vmem>>, vector<1x1x16xf32>
    %259 = vector.shape_cast %258 : vector<1x1x16xf32> to vector<1x16xf32>
    %260 = vector.broadcast %259 : vector<1x16xf32> to vector<16x16xf32>
    %261 = arith.addf %257, %260 : vector<16x16xf32>
    %262 = arith.truncf %247 : vector<16x16xf32> to vector<16x16xbf16>
    %263 = arith.truncf %254 : vector<16x16xf32> to vector<16x16xbf16>
    %cst_163 = arith.constant dense<0.000000e+00> : vector<16x16xf32>
    %264 = tpu.matmul %262, %263, %cst_163 {dimension_numbers = #tpu.dot_dimension_numbers<[1], [1], [0], [0], [0, 0, 1, 0], [], []>} : vector<16x16xbf16>, vector<16x16xbf16>, vector<16x16xf32> -> vector<16x16xf32>
    %cst_164 = arith.constant 2.500000e-01 : f32
    %265 = vector.broadcast %cst_164 : f32 to vector<16x16xf32>
    %266 = arith.mulf %264, %265 : vector<16x16xf32>
    %267 = arith.addf %266, %27 : vector<16x16xf32>
    %268 = math.exp %267 : vector<16x16xf32>
    %cst_165 = arith.constant dense<0.000000e+00> : vector<16xf32>
    %269 = vector.multi_reduction <add>, %268, %cst_165 [1] : vector<16x16xf32> to vector<16xf32>
    %270 = vector.shape_cast %269 : vector<16xf32> to vector<16x1xf32>
    %271 = tpu.reciprocal %270 {approx = true} : vector<16x1xf32> -> vector<16x1xf32>
    %272 = vector.broadcast %271 : vector<16x1xf32> to vector<16x16xf32>
    %273 = arith.mulf %268, %272 : vector<16x16xf32>
    %274 = arith.truncf %273 : vector<16x16xf32> to vector<16x16xbf16>
    %275 = arith.truncf %261 : vector<16x16xf32> to vector<16x16xbf16>
    %cst_166 = arith.constant dense<0.000000e+00> : vector<16x16xf32>
    %276 = tpu.matmul %274, %275, %cst_166 {dimension_numbers = #tpu.dot_dimension_numbers<[1], [0], [0], [1], [0, 0, 1, 1], [], []>} : vector<16x16xbf16>, vector<16x16xbf16>, vector<16x16xf32> -> vector<16x16xf32>
    %277 = arith.truncf %276 : vector<16x16xf32> to vector<16x16xbf16>
    %c3_167 = arith.constant 3 : index
    %c0_168 = arith.constant 0 : index
    %c0_169 = arith.constant 0 : index
    %278 = vector.load %arg11[%c3_167, %c0_168, %c0_169] : memref<4x16x32xbf16, #tpu.memory_space<vmem>>, vector<1x16x32xbf16>
    %279 = vector.shape_cast %278 : vector<1x16x32xbf16> to vector<16x32xbf16>
    %cst_170 = arith.constant dense<0.000000e+00> : vector<16x32xf32>
    %280 = tpu.matmul %277, %279, %cst_170 {dimension_numbers = #tpu.dot_dimension_numbers<[1], [0], [0], [1], [0, 0, 1, 1], [], []>} : vector<16x16xbf16>, vector<16x32xbf16>, vector<16x32xf32> -> vector<16x32xf32>
    %281 = arith.addf %240, %280 : vector<16x32xf32>
    %c1_171 = arith.constant 1 : index
    %c0_172 = arith.constant 0 : index
    %c0_173 = arith.constant 0 : index
    %282 = vector.load %arg12[%c1_171, %c0_172, %c0_173] : memref<2x1x32xf32, #tpu.memory_space<vmem>>, vector<1x1x32xf32>
    %283 = vector.shape_cast %282 : vector<1x1x32xf32> to vector<1x32xf32>
    %284 = vector.broadcast %283 : vector<1x32xf32> to vector<16x32xf32>
    %285 = arith.addf %281, %284 : vector<16x32xf32>
    %286 = arith.addf %285, %197 : vector<16x32xf32>
    %c1_174 = arith.constant 1 : index
    %c0_175 = arith.constant 0 : index
    %c0_176 = arith.constant 0 : index
    %287 = vector.load %arg13[%c1_174, %c0_175, %c0_176] : memref<2x1x32xf32, #tpu.memory_space<vmem>>, vector<1x1x32xf32>
    %288 = vector.shape_cast %287 : vector<1x1x32xf32> to vector<1x32xf32>
    %c1_177 = arith.constant 1 : index
    %c0_178 = arith.constant 0 : index
    %c0_179 = arith.constant 0 : index
    %289 = vector.load %arg14[%c1_177, %c0_178, %c0_179] : memref<2x1x32xf32, #tpu.memory_space<vmem>>, vector<1x1x32xf32>
    %290 = vector.shape_cast %289 : vector<1x1x32xf32> to vector<1x32xf32>
    %cst_180 = arith.constant dense<0.000000e+00> : vector<16xf32>
    %291 = vector.multi_reduction <add>, %286, %cst_180 [1] : vector<16x32xf32> to vector<16xf32>
    %292 = vector.shape_cast %291 : vector<16xf32> to vector<16x1xf32>
    %293 = arith.mulf %286, %286 : vector<16x32xf32>
    %cst_181 = arith.constant dense<0.000000e+00> : vector<16xf32>
    %294 = vector.multi_reduction <add>, %293, %cst_181 [1] : vector<16x32xf32> to vector<16xf32>
    %295 = vector.shape_cast %294 : vector<16xf32> to vector<16x1xf32>
    %cst_182 = arith.constant 3.125000e-02 : f32
    %296 = vector.broadcast %cst_182 : f32 to vector<16x1xf32>
    %297 = arith.mulf %292, %296 : vector<16x1xf32>
    %cst_183 = arith.constant 3.125000e-02 : f32
    %298 = vector.broadcast %cst_183 : f32 to vector<16x1xf32>
    %299 = arith.mulf %295, %298 : vector<16x1xf32>
    %300 = arith.mulf %297, %297 : vector<16x1xf32>
    %301 = arith.subf %299, %300 : vector<16x1xf32>
    %cst_184 = arith.constant 0.000000e+00 : f32
    %302 = vector.broadcast %cst_184 : f32 to vector<16x1xf32>
    %303 = arith.maximumf %301, %302 : vector<16x1xf32>
    %304 = vector.broadcast %297 : vector<16x1xf32> to vector<16x32xf32>
    %305 = arith.subf %286, %304 : vector<16x32xf32>
    %cst_185 = arith.constant 9.99999996E-13 : f32
    %306 = vector.broadcast %cst_185 : f32 to vector<16x1xf32>
    %307 = arith.addf %303, %306 : vector<16x1xf32>
    %308 = math.rsqrt %307 : vector<16x1xf32>
    %309 = vector.broadcast %308 : vector<16x1xf32> to vector<16x32xf32>
    %310 = arith.mulf %305, %309 : vector<16x32xf32>
    %311 = vector.broadcast %288 : vector<1x32xf32> to vector<16x32xf32>
    %312 = arith.mulf %310, %311 : vector<16x32xf32>
    %313 = vector.broadcast %290 : vector<1x32xf32> to vector<16x32xf32>
    %314 = arith.addf %312, %313 : vector<16x32xf32>
    %315 = arith.truncf %314 : vector<16x32xf32> to vector<16x32xbf16>
    %c1_186 = arith.constant 1 : index
    %c0_187 = arith.constant 0 : index
    %c0_188 = arith.constant 0 : index
    %316 = vector.load %arg15[%c1_186, %c0_187, %c0_188] : memref<2x32x64xbf16, #tpu.memory_space<vmem>>, vector<1x32x64xbf16>
    %317 = vector.shape_cast %316 : vector<1x32x64xbf16> to vector<32x64xbf16>
    %cst_189 = arith.constant dense<0.000000e+00> : vector<16x64xf32>
    %318 = tpu.matmul %315, %317, %cst_189 {dimension_numbers = #tpu.dot_dimension_numbers<[1], [0], [0], [1], [0, 0, 1, 1], [], []>} : vector<16x32xbf16>, vector<32x64xbf16>, vector<16x64xf32> -> vector<16x64xf32>
    %c1_190 = arith.constant 1 : index
    %c0_191 = arith.constant 0 : index
    %c0_192 = arith.constant 0 : index
    %319 = vector.load %arg16[%c1_190, %c0_191, %c0_192] : memref<2x1x64xf32, #tpu.memory_space<vmem>>, vector<1x1x64xf32>
    %320 = vector.shape_cast %319 : vector<1x1x64xf32> to vector<1x64xf32>
    %321 = vector.broadcast %320 : vector<1x64xf32> to vector<16x64xf32>
    %322 = arith.addf %318, %321 : vector<16x64xf32>
    %cst_193 = arith.constant 5.000000e-01 : f32
    %323 = vector.broadcast %cst_193 : f32 to vector<16x64xf32>
    %324 = arith.mulf %323, %322 : vector<16x64xf32>
    %cst_194 = arith.constant 0.707106769 : f32
    %325 = vector.broadcast %cst_194 : f32 to vector<16x64xf32>
    %326 = arith.mulf %322, %325 : vector<16x64xf32>
    %327 = math.erf %326 : vector<16x64xf32>
    %cst_195 = arith.constant 1.000000e+00 : f32
    %328 = vector.broadcast %cst_195 : f32 to vector<16x64xf32>
    %329 = arith.addf %328, %327 : vector<16x64xf32>
    %330 = arith.mulf %324, %329 : vector<16x64xf32>
    %331 = arith.truncf %330 : vector<16x64xf32> to vector<16x64xbf16>
    %c1_196 = arith.constant 1 : index
    %c0_197 = arith.constant 0 : index
    %c0_198 = arith.constant 0 : index
    %332 = vector.load %arg17[%c1_196, %c0_197, %c0_198] : memref<2x64x32xbf16, #tpu.memory_space<vmem>>, vector<1x64x32xbf16>
    %333 = vector.shape_cast %332 : vector<1x64x32xbf16> to vector<64x32xbf16>
    %cst_199 = arith.constant dense<0.000000e+00> : vector<16x32xf32>
    %334 = tpu.matmul %331, %333, %cst_199 {dimension_numbers = #tpu.dot_dimension_numbers<[1], [0], [0], [1], [0, 0, 1, 1], [], []>} : vector<16x64xbf16>, vector<64x32xbf16>, vector<16x32xf32> -> vector<16x32xf32>
    %c1_200 = arith.constant 1 : index
    %c0_201 = arith.constant 0 : index
    %c0_202 = arith.constant 0 : index
    %335 = vector.load %arg18[%c1_200, %c0_201, %c0_202] : memref<2x1x32xf32, #tpu.memory_space<vmem>>, vector<1x1x32xf32>
    %336 = vector.shape_cast %335 : vector<1x1x32xf32> to vector<1x32xf32>
    %337 = vector.broadcast %336 : vector<1x32xf32> to vector<16x32xf32>
    %338 = arith.addf %334, %337 : vector<16x32xf32>
    %339 = arith.addf %338, %314 : vector<16x32xf32>
    %c1_203 = arith.constant 1 : index
    %c0_204 = arith.constant 0 : index
    %c0_205 = arith.constant 0 : index
    %340 = vector.load %arg19[%c1_203, %c0_204, %c0_205] : memref<2x1x32xf32, #tpu.memory_space<vmem>>, vector<1x1x32xf32>
    %341 = vector.shape_cast %340 : vector<1x1x32xf32> to vector<1x32xf32>
    %c1_206 = arith.constant 1 : index
    %c0_207 = arith.constant 0 : index
    %c0_208 = arith.constant 0 : index
    %342 = vector.load %arg20[%c1_206, %c0_207, %c0_208] : memref<2x1x32xf32, #tpu.memory_space<vmem>>, vector<1x1x32xf32>
    %343 = vector.shape_cast %342 : vector<1x1x32xf32> to vector<1x32xf32>
    %cst_209 = arith.constant dense<0.000000e+00> : vector<16xf32>
    %344 = vector.multi_reduction <add>, %339, %cst_209 [1] : vector<16x32xf32> to vector<16xf32>
    %345 = vector.shape_cast %344 : vector<16xf32> to vector<16x1xf32>
    %346 = arith.mulf %339, %339 : vector<16x32xf32>
    %cst_210 = arith.constant dense<0.000000e+00> : vector<16xf32>
    %347 = vector.multi_reduction <add>, %346, %cst_210 [1] : vector<16x32xf32> to vector<16xf32>
    %348 = vector.shape_cast %347 : vector<16xf32> to vector<16x1xf32>
    %cst_211 = arith.constant 3.125000e-02 : f32
    %349 = vector.broadcast %cst_211 : f32 to vector<16x1xf32>
    %350 = arith.mulf %345, %349 : vector<16x1xf32>
    %cst_212 = arith.constant 3.125000e-02 : f32
    %351 = vector.broadcast %cst_212 : f32 to vector<16x1xf32>
    %352 = arith.mulf %348, %351 : vector<16x1xf32>
    %353 = arith.mulf %350, %350 : vector<16x1xf32>
    %354 = arith.subf %352, %353 : vector<16x1xf32>
    %cst_213 = arith.constant 0.000000e+00 : f32
    %355 = vector.broadcast %cst_213 : f32 to vector<16x1xf32>
    %356 = arith.maximumf %354, %355 : vector<16x1xf32>
    %357 = vector.broadcast %350 : vector<16x1xf32> to vector<16x32xf32>
    %358 = arith.subf %339, %357 : vector<16x32xf32>
    %cst_214 = arith.constant 9.99999996E-13 : f32
    %359 = vector.broadcast %cst_214 : f32 to vector<16x1xf32>
    %360 = arith.addf %356, %359 : vector<16x1xf32>
    %361 = math.rsqrt %360 : vector<16x1xf32>
    %362 = vector.broadcast %361 : vector<16x1xf32> to vector<16x32xf32>
    %363 = arith.mulf %358, %362 : vector<16x32xf32>
    %364 = vector.broadcast %341 : vector<1x32xf32> to vector<16x32xf32>
    %365 = arith.mulf %363, %364 : vector<16x32xf32>
    %366 = vector.broadcast %343 : vector<1x32xf32> to vector<16x32xf32>
    %367 = arith.addf %365, %366 : vector<16x32xf32>
    %368 = arith.truncf %367 : vector<16x32xf32> to vector<16x32xbf16>
    %c0_215 = arith.constant 0 : index
    %c0_216 = arith.constant 0 : index
    %369 = vector.load %arg21[%c0_215, %c0_216] : memref<32x128xbf16, #tpu.memory_space<vmem>>, vector<32x128xbf16>
    %cst_217 = arith.constant dense<0.000000e+00> : vector<16x128xf32>
    %370 = tpu.matmul %368, %369, %cst_217 {dimension_numbers = #tpu.dot_dimension_numbers<[1], [0], [0], [1], [0, 0, 1, 1], [], []>} : vector<16x32xbf16>, vector<32x128xbf16>, vector<16x128xf32> -> vector<16x128xf32>
    %c0_218 = arith.constant 0 : index
    %c0_219 = arith.constant 0 : index
    %371 = vector.load %arg22[%c0_218, %c0_219] : memref<1x128xf32, #tpu.memory_space<vmem>>, vector<1x128xf32>
    %372 = vector.broadcast %371 : vector<1x128xf32> to vector<16x128xf32>
    %373 = arith.addf %370, %372 : vector<16x128xf32>
    %c0_220 = arith.constant 0 : index
    %c0_221 = arith.constant 0 : index
    %374 = vector.load %arg23[%c0_220, %c0_221] : memref<16x128xf32, #tpu.memory_space<vmem>>, vector<16x128xf32>
    tpu.vector_store %arg23[%c0_220, %c0_221], %373 {strides = array<i32>} : memref<16x128xf32, #tpu.memory_space<vmem>>, vector<16x128xf32>,
    return
  }
  func.func @transform_0(%arg0: i32) -> (i32, i32) {
    %c0_i32 = arith.constant 0 : i32
    %c0_i32_0 = arith.constant 0 : i32
    %c0_i32_1 = arith.constant 0 : i32
    return %c0_i32, %c0_i32_0 : i32, i32
  }
  func.func @transform_1(%arg0: i32) -> (i32, i32) {
    %c0_i32 = arith.constant 0 : i32
    %c0_i32_0 = arith.constant 0 : i32
    %c0_i32_1 = arith.constant 0 : i32
    return %c0_i32, %c0_i32_0 : i32, i32
  }
  func.func @transform_2(%arg0: i32) -> (i32, i32) {
    %c0_i32 = arith.constant 0 : i32
    %c0_i32_0 = arith.constant 0 : i32
    %c0_i32_1 = arith.constant 0 : i32
    return %c0_i32, %c0_i32_0 : i32, i32
  }
  func.func @transform_3(%arg0: i32) -> (i32, i32) {
    %c0_i32 = arith.constant 0 : i32
    %c0_i32_0 = arith.constant 0 : i32
    %c0_i32_1 = arith.constant 0 : i32
    return %c0_i32, %c0_i32_0 : i32, i32
  }
  func.func @transform_4(%arg0: i32) -> (i32, i32, i32) {
    %c0_i32 = arith.constant 0 : i32
    %c0_i32_0 = arith.constant 0 : i32
    %c0_i32_1 = arith.constant 0 : i32
    %c0_i32_2 = arith.constant 0 : i32
    return %c0_i32, %c0_i32_0, %c0_i32_1 : i32, i32, i32
  }
  func.func @transform_5(%arg0: i32) -> (i32, i32, i32) {
    %c0_i32 = arith.constant 0 : i32
    %c0_i32_0 = arith.constant 0 : i32
    %c0_i32_1 = arith.constant 0 : i32
    %c0_i32_2 = arith.constant 0 : i32
    return %c0_i32, %c0_i32_0, %c0_i32_1 : i32, i32, i32
  }
  func.func @transform_6(%arg0: i32) -> (i32, i32, i32) {
    %c0_i32 = arith.constant 0 : i32
    %c0_i32_0 = arith.constant 0 : i32
    %c0_i32_1 = arith.constant 0 : i32
    %c0_i32_2 = arith.constant 0 : i32
    return %c0_i32, %c0_i32_0, %c0_i32_1 : i32, i32, i32
  }
  func.func @transform_7(%arg0: i32) -> (i32, i32, i32) {
    %c0_i32 = arith.constant 0 : i32
    %c0_i32_0 = arith.constant 0 : i32
    %c0_i32_1 = arith.constant 0 : i32
    %c0_i32_2 = arith.constant 0 : i32
    return %c0_i32, %c0_i32_0, %c0_i32_1 : i32, i32, i32
  }
  func.func @transform_8(%arg0: i32) -> (i32, i32, i32) {
    %c0_i32 = arith.constant 0 : i32
    %c0_i32_0 = arith.constant 0 : i32
    %c0_i32_1 = arith.constant 0 : i32
    %c0_i32_2 = arith.constant 0 : i32
    return %c0_i32, %c0_i32_0, %c0_i32_1 : i32, i32, i32
  }
  func.func @transform_9(%arg0: i32) -> (i32, i32, i32) {
    %c0_i32 = arith.constant 0 : i32
    %c0_i32_0 = arith.constant 0 : i32
    %c0_i32_1 = arith.constant 0 : i32
    %c0_i32_2 = arith.constant 0 : i32
    return %c0_i32, %c0_i32_0, %c0_i32_1 : i32, i32, i32
  }
  func.func @transform_10(%arg0: i32) -> (i32, i32, i32) {
    %c0_i32 = arith.constant 0 : i32
    %c0_i32_0 = arith.constant 0 : i32
    %c0_i32_1 = arith.constant 0 : i32
    %c0_i32_2 = arith.constant 0 : i32
    return %c0_i32, %c0_i32_0, %c0_i32_1 : i32, i32, i32
  }
  func.func @transform_11(%arg0: i32) -> (i32, i32, i32) {
    %c0_i32 = arith.constant 0 : i32
    %c0_i32_0 = arith.constant 0 : i32
    %c0_i32_1 = arith.constant 0 : i32
    %c0_i32_2 = arith.constant 0 : i32
    return %c0_i32, %c0_i32_0, %c0_i32_1 : i32, i32, i32
  }
  func.func @transform_12(%arg0: i32) -> (i32, i32, i32) {
    %c0_i32 = arith.constant 0 : i32
    %c0_i32_0 = arith.constant 0 : i32
    %c0_i32_1 = arith.constant 0 : i32
    %c0_i32_2 = arith.constant 0 : i32
    return %c0_i32, %c0_i32_0, %c0_i32_1 : i32, i32, i32
  }
  func.func @transform_13(%arg0: i32) -> (i32, i32, i32) {
    %c0_i32 = arith.constant 0 : i32
    %c0_i32_0 = arith.constant 0 : i32
    %c0_i32_1 = arith.constant 0 : i32
    %c0_i32_2 = arith.constant 0 : i32
    return %c0_i32, %c0_i32_0, %c0_i32_1 : i32, i32, i32
  }
  func.func @transform_14(%arg0: i32) -> (i32, i32, i32) {
    %c0_i32 = arith.constant 0 : i32
    %c0_i32_0 = arith.constant 0 : i32
    %c0_i32_1 = arith.constant 0 : i32
    %c0_i32_2 = arith.constant 0 : i32
    return %c0_i32, %c0_i32_0, %c0_i32_1 : i32, i32, i32
  }
  func.func @transform_15(%arg0: i32) -> (i32, i32, i32) {
    %c0_i32 = arith.constant 0 : i32
    %c0_i32_0 = arith.constant 0 : i32
    %c0_i32_1 = arith.constant 0 : i32
    %c0_i32_2 = arith.constant 0 : i32
    return %c0_i32, %c0_i32_0, %c0_i32_1 : i32, i32, i32
  }
  func.func @transform_16(%arg0: i32) -> (i32, i32, i32) {
    %c0_i32 = arith.constant 0 : i32
    %c0_i32_0 = arith.constant 0 : i32
    %c0_i32_1 = arith.constant 0 : i32
    %c0_i32_2 = arith.constant 0 : i32
    return %c0_i32, %c0_i32_0, %c0_i32_1 : i32, i32, i32
  }
  func.func @transform_17(%arg0: i32) -> (i32, i32, i32) {
    %c0_i32 = arith.constant 0 : i32
    %c0_i32_0 = arith.constant 0 : i32
    %c0_i32_1 = arith.constant 0 : i32
    %c0_i32_2 = arith.constant 0 : i32
    return %c0_i32, %c0_i32_0, %c0_i32_1 : i32, i32, i32
  }
  func.func @transform_18(%arg0: i32) -> (i32, i32, i32) {
    %c0_i32 = arith.constant 0 : i32
    %c0_i32_0 = arith.constant 0 : i32
    %c0_i32_1 = arith.constant 0 : i32
    %c0_i32_2 = arith.constant 0 : i32
    return %c0_i32, %c0_i32_0, %c0_i32_1 : i32, i32, i32
  }
  func.func @transform_19(%arg0: i32) -> (i32, i32, i32) {
    %c0_i32 = arith.constant 0 : i32
    %c0_i32_0 = arith.constant 0 : i32
    %c0_i32_1 = arith.constant 0 : i32
    %c0_i32_2 = arith.constant 0 : i32
    return %c0_i32, %c0_i32_0, %c0_i32_1 : i32, i32, i32
  }
  func.func @transform_20(%arg0: i32) -> (i32, i32) {
    %c0_i32 = arith.constant 0 : i32
    %c0_i32_0 = arith.constant 0 : i32
    %c0_i32_1 = arith.constant 0 : i32
    return %c0_i32, %c0_i32_0 : i32, i32
  }
  func.func @transform_21(%arg0: i32) -> (i32, i32) {
    %c0_i32 = arith.constant 0 : i32
    %c0_i32_0 = arith.constant 0 : i32
    %c0_i32_1 = arith.constant 0 : i32
    return %c0_i32, %c0_i32_0 : i32, i32
  }
  func.func @transform_22(%arg0: i32) -> (i32, i32) {
    %c0_i32 = arith.constant 0 : i32
    %c0_i32_0 = arith.constant 0 : i32
    %c0_i32_1 = arith.constant 0 : i32
    return %c0_i32, %c0_i32_0 : i32, i32
  }
}

</mosaic_0001>

<llo_original>
// kernel: bert_segmenter_forward.1
$region0: #{bert_segmenter_forward.1}
  #allocation0 [shape = 'u32[]', space=smem, size = 0x4, offset = 0x4, fixed_abs, tag = 'smem constant byte address 0x4 - core index']
  #allocation1 [shape = 'u32[72,128]{1,0:T(1,128)}', space=vmem, size = 0x9000, scoped, tag = 'internal scratch']
  %s0 = inlined_call_operand.vmem [shape: f32[16,32], index: 0, kind: input, shape index: {}]
  %s1 = inlined_call_operand.vmem [shape: f32[16,16], index: 1, kind: input, shape index: {}]
  %s2 = inlined_call_operand.vmem [shape: f32[1,32], index: 2, kind: input, shape index: {}]
  %s3 = inlined_call_operand.vmem [shape: f32[1,32], index: 3, kind: input, shape index: {}]
  %s4 = inlined_call_operand.vmem [shape: bf16[4,32,16], index: 4, kind: input, shape index: {}]
  %s5 = inlined_call_operand.vmem [shape: f32[4,1,16], index: 5, kind: input, shape index: {}]
  %s6 = inlined_call_operand.vmem [shape: bf16[4,32,16], index: 6, kind: input, shape index: {}]
  %s7 = inlined_call_operand.vmem [shape: f32[4,1,16], index: 7, kind: input, shape index: {}]
  %s8 = inlined_call_operand.vmem [shape: bf16[4,32,16], index: 8, kind: input, shape index: {}]
  %s9 = inlined_call_operand.vmem [shape: f32[4,1,16], index: 9, kind: input, shape index: {}]
  %s10 = inlined_call_operand.vmem [shape: bf16[4,16,32], index: 10, kind: input, shape index: {}]
  %s11 = inlined_call_operand.vmem [shape: f32[2,1,32], index: 11, kind: input, shape index: {}]
  %s12 = inlined_call_operand.vmem [shape: f32[2,1,32], index: 12, kind: input, shape index: {}]
  %s13 = inlined_call_operand.vmem [shape: f32[2,1,32], index: 13, kind: input, shape index: {}]
  %s14 = inlined_call_operand.vmem [shape: bf16[2,32,64], index: 14, kind: input, shape index: {}]
  %s15 = inlined_call_operand.vmem [shape: f32[2,1,64], index: 15, kind: input, shape index: {}]
  %s16 = inlined_call_operand.vmem [shape: bf16[2,64,32], index: 16, kind: input, shape index: {}]
  %s17 = inlined_call_operand.vmem [shape: f32[2,1,32], index: 17, kind: input, shape index: {}]
  %s18 = inlined_call_operand.vmem [shape: f32[2,1,32], index: 18, kind: input, shape index: {}]
  %s19 = inlined_call_operand.vmem [shape: f32[2,1,32], index: 19, kind: input, shape index: {}]
  %s20 = inlined_call_operand.vmem [shape: bf16[32,128], index: 20, kind: input, shape index: {}]
  %s21 = inlined_call_operand.vmem [shape: f32[1,128], index: 21, kind: input, shape index: {}]
  %s22 = inlined_call_operand.vmem [shape: f32[16,128], index: 22, kind: output, shape index: {}]
  %s23 = sld [smem:[#allocation0]]
  $region98: #{bert_segmenter_forward.1} parent=0
    _
  %s25 = ssub.s32 1, %s23
  %s26 = scalar_select 0, %s25, %s23
  // Predicated region
  $region2: #{bert_segmenter_forward.1} parent=0 // pred_check
    _
  $region3: #{bert_segmenter_forward.1} parent=0 // pred_check_branch
    %28 = sbr.rel (0) target = $region5
  $region4: #{bert_segmenter_forward.1} parent=0 // pred_region
    _
  $region5: #{bert_segmenter_forward.1} parent=0 // pred_fallthru
    _
  // Predicated region
  $region6: #{bert_segmenter_forward.1} parent=0 // pred_check
    _
  $region7: #{bert_segmenter_forward.1} parent=0 // pred_check_branch
    %30 = sbr.rel (0) target = $region9
  $region8: #{bert_segmenter_forward.1} parent=0 // pred_region
    _
  $region9: #{bert_segmenter_forward.1} parent=0 // pred_fallthru
    _
  // Predicated region
  $region10: #{bert_segmenter_forward.1} parent=0 // pred_check
    _
  $region11: #{bert_segmenter_forward.1} parent=0 // pred_check_branch
    %32 = sbr.rel (0) target = $region13
  $region12: #{bert_segmenter_forward.1} parent=0 // pred_region
    _
  $region13: #{bert_segmenter_forward.1} parent=0 // pred_fallthru
    _
  // Predicated region
  $region14: #{bert_segmenter_forward.1} parent=0 // pred_check
    _
  $region15: #{bert_segmenter_forward.1} parent=0 // pred_check_branch
    %34 = sbr.rel (0) target = $region17
  $region16: #{bert_segmenter_forward.1} parent=0 // pred_region
    _
  $region17: #{bert_segmenter_forward.1} parent=0 // pred_fallthru
    _
  // Predicated region
  $region18: #{bert_segmenter_forward.1} parent=0 // pred_check
    _
  $region19: #{bert_segmenter_forward.1} parent=0 // pred_check_branch
    %36 = sbr.rel (0) target = $region21
  $region20: #{bert_segmenter_forward.1} parent=0 // pred_region
    _
  $region21: #{bert_segmenter_forward.1} parent=0 // pred_fallthru
    _
  // Predicated region
  $region22: #{bert_segmenter_forward.1} parent=0 // pred_check
    _
  $region23: #{bert_segmenter_forward.1} parent=0 // pred_check_branch
    %38 = sbr.rel (0) target = $region25
  $region24: #{bert_segmenter_forward.1} parent=0 // pred_region
    _
  $region25: #{bert_segmenter_forward.1} parent=0 // pred_fallthru
    _
  // Predicated region
  $region26: #{bert_segmenter_forward.1} parent=0 // pred_check
    _
  $region27: #{bert_segmenter_forward.1} parent=0 // pred_check_branch
    %40 = sbr.rel (0) target = $region29
  $region28: #{bert_segmenter_forward.1} parent=0 // pred_region
    _
  $region29: #{bert_segmenter_forward.1} parent=0 // pred_fallthru
    _
  // Predicated region
  $region30: #{bert_segmenter_forward.1} parent=0 // pred_check
    _
  $region31: #{bert_segmenter_forward.1} parent=0 // pred_check_branch
    %42 = sbr.rel (0) target = $region33
  $region32: #{bert_segmenter_forward.1} parent=0 // pred_region
    _
  $region33: #{bert_segmenter_forward.1} parent=0 // pred_fallthru
    _
  // Predicated region
  $region34: #{bert_segmenter_forward.1} parent=0 // pred_check
    _
  $region35: #{bert_segmenter_forward.1} parent=0 // pred_check_branch
    %44 = sbr.rel (0) target = $region37
  $region36: #{bert_segmenter_forward.1} parent=0 // pred_region
    _
  $region37: #{bert_segmenter_forward.1} parent=0 // pred_fallthru
    _
  // Predicated region
  $region38: #{bert_segmenter_forward.1} parent=0 // pred_check
    _
  $region39: #{bert_segmenter_forward.1} parent=0 // pred_check_branch
    %46 = sbr.rel (0) target = $region41
  $region40: #{bert_segmenter_forward.1} parent=0 // pred_region
    _
  $region41: #{bert_segmenter_forward.1} parent=0 // pred_fallthru
    _
  // Predicated region
  $region42: #{bert_segmenter_forward.1} parent=0 // pred_check
    _
  $region43: #{bert_segmenter_forward.1} parent=0 // pred_check_branch
    %48 = sbr.rel (0) target = $region45
  $region44: #{bert_segmenter_forward.1} parent=0 // pred_region
    _
  $region45: #{bert_segmenter_forward.1} parent=0 // pred_fallthru
    _
  // Predicated region
  $region46: #{bert_segmenter_forward.1} parent=0 // pred_check
    _
  $region47: #{bert_segmenter_forward.1} parent=0 // pred_check_branch
    %50 = sbr.rel (0) target = $region49
  $region48: #{bert_segmenter_forward.1} parent=0 // pred_region
    _
  $region49: #{bert_segmenter_forward.1} parent=0 // pred_fallthru
    _
  // Predicated region
  $region50: #{bert_segmenter_forward.1} parent=0 // pred_check
    _
  $region51: #{bert_segmenter_forward.1} parent=0 // pred_check_branch
    %52 = sbr.rel (0) target = $region53
  $region52: #{bert_segmenter_forward.1} parent=0 // pred_region
    _
  $region53: #{bert_segmenter_forward.1} parent=0 // pred_fallthru
    _
  // Predicated region
  $region54: #{bert_segmenter_forward.1} parent=0 // pred_check
    _
  $region55: #{bert_segmenter_forward.1} parent=0 // pred_check_branch
    %54 = sbr.rel (0) target = $region57
  $region56: #{bert_segmenter_forward.1} parent=0 // pred_region
    _
  $region57: #{bert_segmenter_forward.1} parent=0 // pred_fallthru
    _
  // Predicated region
  $region58: #{bert_segmenter_forward.1} parent=0 // pred_check
    _
  $region59: #{bert_segmenter_forward.1} parent=0 // pred_check_branch
    %56 = sbr.rel (0) target = $region61
  $region60: #{bert_segmenter_forward.1} parent=0 // pred_region
    _
  $region61: #{bert_segmenter_forward.1} parent=0 // pred_fallthru
    _
  // Predicated region
  $region62: #{bert_segmenter_forward.1} parent=0 // pred_check
    _
  $region63: #{bert_segmenter_forward.1} parent=0 // pred_check_branch
    %58 = sbr.rel (0) target = $region65
  $region64: #{bert_segmenter_forward.1} parent=0 // pred_region
    _
  $region65: #{bert_segmenter_forward.1} parent=0 // pred_fallthru
    _
  // Predicated region
  $region66: #{bert_segmenter_forward.1} parent=0 // pred_check
    _
  $region67: #{bert_segmenter_forward.1} parent=0 // pred_check_branch
    %60 = sbr.rel (0) target = $region69
  $region68: #{bert_segmenter_forward.1} parent=0 // pred_region
    _
  $region69: #{bert_segmenter_forward.1} parent=0 // pred_fallthru
    _
  // Predicated region
  $region70: #{bert_segmenter_forward.1} parent=0 // pred_check
    _
  $region71: #{bert_segmenter_forward.1} parent=0 // pred_check_branch
    %62 = sbr.rel (0) target = $region73
  $region72: #{bert_segmenter_forward.1} parent=0 // pred_region
    _
  $region73: #{bert_segmenter_forward.1} parent=0 // pred_fallthru
    _
  // Predicated region
  $region74: #{bert_segmenter_forward.1} parent=0 // pred_check
    _
  $region75: #{bert_segmenter_forward.1} parent=0 // pred_check_branch
    %64 = sbr.rel (0) target = $region77
  $region76: #{bert_segmenter_forward.1} parent=0 // pred_region
    _
  $region77: #{bert_segmenter_forward.1} parent=0 // pred_fallthru
    _
  // Predicated region
  $region78: #{bert_segmenter_forward.1} parent=0 // pred_check
    _
  $region79: #{bert_segmenter_forward.1} parent=0 // pred_check_branch
    %66 = sbr.rel (0) target = $region81
  $region80: #{bert_segmenter_forward.1} parent=0 // pred_region
    _
  $region81: #{bert_segmenter_forward.1} parent=0 // pred_fallthru
    _
  // Predicated region
  $region82: #{bert_segmenter_forward.1} parent=0 // pred_check
    _
  $region83: #{bert_segmenter_forward.1} parent=0 // pred_check_branch
    %68 = sbr.rel (0) target = $region85
  $region84: #{bert_segmenter_forward.1} parent=0 // pred_region
    _
  $region85: #{bert_segmenter_forward.1} parent=0 // pred_fallthru
    _
  // Predicated region
  $region86: #{bert_segmenter_forward.1} parent=0 // pred_check
    _
  $region87: #{bert_segmenter_forward.1} parent=0 // pred_check_branch
    %70 = sbr.rel (0) target = $region89
  $region88: #{bert_segmenter_forward.1} parent=0 // pred_region
    _
  $region89: #{bert_segmenter_forward.1} parent=0 // pred_fallthru
    _
  %v72 = vld [vmem:[%s0] sm:$0xff]
  %v73 = vld [vmem:[%s0 + $0x8] sm:$0xff]
  %v74 = vld [vmem:[%s2] sm:$0x1]
  %v75 = vld [vmem:[%s3] sm:$0x1]
  %vm76 = vcmask 261120
  %v77 = vsel %vm76, %v72, 0.0
  %78 = vadd.xlane.f32.xlu0 %v77
  %v79 = vpop.xlane.xlu0 %78
  %v80 = vsel %vm76, %v73, 0.0
  %81 = vadd.xlane.f32.xlu0 %v80
  %v82 = vpop.xlane.xlu0 %81
  %v83 = vmul.f32 %v72, %v72
  %v84 = vmul.f32 %v73, %v73
  %v85 = vsel %vm76, %v83, 0.0
  %86 = vadd.xlane.f32.xlu0 %v85
  %v87 = vpop.xlane.xlu0 %86
  %v88 = vsel %vm76, %v84, 0.0
  %89 = vadd.xlane.f32.xlu0 %v88
  %v90 = vpop.xlane.xlu0 %89
  %v91 = vmul.f32 %v79, 0.03125
  %v92 = vmul.f32 %v82, 0.03125
  %v93 = vmul.f32 %v87, 0.03125
  %v94 = vmul.f32 %v90, 0.03125
  %v95 = vmul.f32 %v91, %v91
  %v96 = vmul.f32 %v92, %v92
  %v97 = vsub.f32 %v93, %v95
  %v98 = vsub.f32 %v94, %v96
  %v99 = vmax.f32 %v97, 0.0
  %v100 = vmax.f32 %v98, 0.0
  %v101 = vsub.f32 %v72, %v91
  %v102 = vsub.f32 %v73, %v92
  %v103 = vadd.f32 %v99, 1e-12
  %v104 = vadd.f32 %v100, 1e-12
  %v105 = vrsqrt.pop %v103
  %v106 = vmul.f32 %v105, %v103
  %v107 = vmul.f32 %v106, %v105
  %v108 = vmul.f32 0.5, %v107
  %v109 = vsub.f32 1.5, %v108
  %v110 = vmul.f32 %v105, %v109
  %vm111 = vweird.f32 %v103
  %vm112 = vweird.f32 %v105
  %vm113 = vmor %vm111, %vm112
  %v114 = vsel %vm113, %v105, %v110
  %v115 = vrsqrt.pop %v104
  %v116 = vmul.f32 %v115, %v104
  %v117 = vmul.f32 %v116, %v115
  %v118 = vmul.f32 0.5, %v117
  %v119 = vsub.f32 1.5, %v118
  %v120 = vmul.f32 %v115, %v119
  %vm121 = vweird.f32 %v104
  %vm122 = vweird.f32 %v115
  %vm123 = vmor %vm121, %vm122
  %v124 = vsel %vm123, %v115, %v120
  %v125 = vmul.f32 %v101, %v114
  %v126 = vmul.f32 %v102, %v124
  %v128 = vperm.slane %v74, 0
  %v130 = vmul.f32 %v125, %v128
  %v131 = vmul.f32 %v126, %v128
  %v133 = vperm.slane %v75, 0
  %v135 = vadd.f32 %v130, %v133
  %v136 = vadd.f32 %v131, %v133
  %v137 = vld [vmem:[%s1] sm:$0xff]
  %v138 = vld [vmem:[%s1 + $0x8] sm:$0xff]
  %v139 = vpack.c.bf16 %v136, %v135
  %v140 = vld [vmem:[%s4] sm:$0xf]
  %v141 = vld [vmem:[%s4 + $0x4] sm:$0xf]
  %v142 = vld [vmem:[%s4 + $0x8] sm:$0xf]
  %v143 = vld [vmem:[%s4 + $0xc] sm:$0xf]
  %v144 = vld [vmem:[%s5] sm:$0x1]
  %v146 = vperm.slane %v144, 0
  %v152 = vunpack.c.l.b16 %v140
  %v153 = vunpack.c.l.b16 %v141
  %v154 = vunpack.c.l.b16 %v142
  %v155 = vunpack.c.l.b16 %v143
  %v156 = vpack.c.b16 %v153, %v152
  %v157 = vpack.c.b16 %v155, %v154
  %v161 = vsel %vm76, %v139, 0
  %163 = vmatpush.bf16.msra.mxu0 0
  %164 = vmatpush.bf16.msra.mxu0 0
  %165 = vmatpush.bf16.msra.mxu0 0
  %166 = vmatpush.bf16.msra.mxu0 0
  %167 = vmatpush.bf16.msra.mxu0 0
  %168 = vmatpush.bf16.msra.mxu0 0
  %169 = vmatpush.bf16.msra.mxu0 %v157
  %170 = vmatpush.bf16.msra.mxu0 %v156
  %171 = vmatmul.bf16.gmra.mxu0 %v161
  %v172 = vpop.f32.mrf.mxu0
  %v173 = vadd.f32 %v146, %v172
  %v174 = vpop.f32.mrf.mxu0
  %v175 = vadd.f32 %v146, %v174
  %176 = vdwg.mxu0
  %v177 = vld [vmem:[%s6] sm:$0xf]
  %v178 = vld [vmem:[%s6 + $0x4] sm:$0xf]
  %v179 = vld [vmem:[%s6 + $0x8] sm:$0xf]
  %v180 = vld [vmem:[%s6 + $0xc] sm:$0xf]
  %v181 = vld [vmem:[%s7] sm:$0x1]
  %v183 = vperm.slane %v181, 0
  %v189 = vunpack.c.l.b16 %v177
  %v190 = vunpack.c.l.b16 %v178
  %v191 = vunpack.c.l.b16 %v179
  %v192 = vunpack.c.l.b16 %v180
  %v193 = vpack.c.b16 %v190, %v189
  %v194 = vpack.c.b16 %v192, %v191
  %197 = vmatpush.bf16.msra.mxu0 0
  %198 = vmatpush.bf16.msra.mxu0 0
  %199 = vmatpush.bf16.msra.mxu0 0
  %200 = vmatpush.bf16.msra.mxu0 0
  %201 = vmatpush.bf16.msra.mxu0 0
  %202 = vmatpush.bf16.msra.mxu0 0
  %203 = vmatpush.bf16.msra.mxu0 %v194
  %204 = vmatpush.bf16.msra.mxu0 %v193
  %205 = vmatmul.bf16.gmra.mxu0 %v161
  %v206 = vpop.f32.mrf.mxu0
  %v207 = vadd.f32 %v183, %v206
  %v208 = vpop.f32.mrf.mxu0
  %v209 = vadd.f32 %v183, %v208
  %210 = vdwg.mxu0
  %v211 = vld [vmem:[%s8] sm:$0xf]
  %v212 = vld [vmem:[%s8 + $0x4] sm:$0xf]
  %v213 = vld [vmem:[%s8 + $0x8] sm:$0xf]
  %v214 = vld [vmem:[%s8 + $0xc] sm:$0xf]
  %v215 = vld [vmem:[%s9] sm:$0x1]
  %v217 = vperm.slane %v215, 0
  %v223 = vunpack.c.l.b16 %v211
  %v224 = vunpack.c.l.b16 %v212
  %v225 = vunpack.c.l.b16 %v213
  %v226 = vunpack.c.l.b16 %v214
  %v227 = vpack.c.b16 %v224, %v223
  %v228 = vpack.c.b16 %v226, %v225
  %231 = vmatpush.bf16.msra.mxu0 0
  %232 = vmatpush.bf16.msra.mxu0 0
  %233 = vmatpush.bf16.msra.mxu0 0
  %234 = vmatpush.bf16.msra.mxu0 0
  %235 = vmatpush.bf16.msra.mxu0 0
  %236 = vmatpush.bf16.msra.mxu0 0
  %237 = vmatpush.bf16.msra.mxu0 %v228
  %238 = vmatpush.bf16.msra.mxu0 %v227
  %239 = vmatmul.bf16.gmra.mxu0 %v161
  %v240 = vpop.f32.mrf.mxu0
  %v241 = vadd.f32 %v217, %v240
  %v242 = vpop.f32.mrf.mxu0
  %v243 = vadd.f32 %v217, %v242
  %244 = vdwg.mxu0
  %v245 = vpack.c.bf16 %v175, %v173
  %v246 = vpack.c.bf16 %v209, %v207
  %vm247 = vcmask 130048
  %v249 = vsel %vm247, %v245, 0
  %v252 = vsel %vm247, %v246, 0
  %254 = vmatpush.bf16.xpose.msra.mxu0 0
  %255 = vmatpush.bf16.xpose.msra.mxu0 0
  %256 = vmatpush.bf16.xpose.msra.mxu0 0
  %257 = vmatpush.bf16.xpose.msra.mxu0 0
  %258 = vmatpush.bf16.xpose.msra.mxu0 0
  %259 = vmatpush.bf16.xpose.msra.mxu0 0
  %260 = vmatpush.bf16.xpose.msra.mxu0 0
  %261 = vmatpush.bf16.xpose.msra.mxu0 %v252
  %262 = vmatmul.bf16.gmra.mxu0 %v249
  %v263 = vpop.f32.mrf.mxu0
  %v264 = vadd.f32 0.0, %v263
  %v265 = vpop.f32.mrf.mxu0
  %v266 = vadd.f32 0.0, %v265
  %267 = vdwg.mxu0
  %v268 = vmul.f32 %v264, 0.25
  %v269 = vmul.f32 %v266, 0.25
  %v270 = vadd.f32 %v268, %v137
  %v271 = vadd.f32 %v269, %v138
  %v272 = vmul.f32 %v270, 1.442695
  %v273 = vpow.pop %v272
  %v274 = vmul.f32 %v271, 1.442695
  %v275 = vpow.pop %v274
  %v276 = vsel %vm247, %v273, 0.0
  %277 = vadd.xlane.f32.xlu0 %v276
  %v278 = vpop.xlane.xlu0 %277
  %v279 = vsel %vm247, %v275, 0.0
  %280 = vadd.xlane.f32.xlu0 %v279
  %v281 = vpop.xlane.xlu0 %280
  %v282 = vrcp.pop %v278
  %v283 = vrcp.pop %v281
  %v284 = vmul.f32 %v273, %v282
  %v285 = vmul.f32 %v275, %v283
  %v286 = vpack.c.bf16 %v285, %v284
  %v287 = vpack.c.bf16 %v243, %v241
  %v289 = vsel %vm247, %v286, 0
  %291 = vmatpush.bf16.msra.mxu0 0
  %292 = vmatpush.bf16.msra.mxu0 0
  %293 = vmatpush.bf16.msra.mxu0 0
  %294 = vmatpush.bf16.msra.mxu0 0
  %295 = vmatpush.bf16.msra.mxu0 0
  %296 = vmatpush.bf16.msra.mxu0 0
  %297 = vmatpush.bf16.msra.mxu0 0
  %298 = vmatpush.bf16.msra.mxu0 %v287
  %299 = vmatmul.bf16.gmra.mxu0 %v289
  %v300 = vpop.f32.mrf.mxu0
  %v301 = vadd.f32 0.0, %v300
  %v302 = vpop.f32.mrf.mxu0
  %v303 = vadd.f32 0.0, %v302
  %304 = vdwg.mxu0
  %v305 = vpack.c.bf16 %v303, %v301
  %v306 = vld [vmem:[%s10] sm:$0xf]
  %v307 = vld [vmem:[%s10 + $0x4] sm:$0xf]
  %s308 = scalar_lea.vmem %s4, 16
  %v309 = vld [vmem:[%s308] sm:$0xf]
  %v310 = vld [vmem:[%s308 + $0x4] sm:$0xf]
  %v311 = vld [vmem:[%s308 + $0x8] sm:$0xf]
  %v312 = vld [vmem:[%s308 + $0xc] sm:$0xf]
  %s313 = scalar_lea.vmem %s5, 1
  %v314 = vld [vmem:[%s313] sm:$0x1]
  %v316 = vperm.slane %v314, 0
  %v322 = vunpack.c.l.b16 %v309
  %v323 = vunpack.c.l.b16 %v310
  %v324 = vunpack.c.l.b16 %v311
  %v325 = vunpack.c.l.b16 %v312
  %v326 = vpack.c.b16 %v323, %v322
  %v327 = vpack.c.b16 %v325, %v324
  %330 = vmatpush.bf16.msra.mxu0 0
  %331 = vmatpush.bf16.msra.mxu0 0
  %332 = vmatpush.bf16.msra.mxu0 0
  %333 = vmatpush.bf16.msra.mxu0 0
  %334 = vmatpush.bf16.msra.mxu0 0
  %335 = vmatpush.bf16.msra.mxu0 0
  %336 = vmatpush.bf16.msra.mxu0 %v327
  %337 = vmatpush.bf16.msra.mxu0 %v326
  %338 = vmatmul.bf16.gmra.mxu0 %v161
  %v339 = vpop.f32.mrf.mxu0
  %v340 = vadd.f32 %v316, %v339
  %v341 = vpop.f32.mrf.mxu0
  %v342 = vadd.f32 %v316, %v341
  %343 = vdwg.mxu0
  %s344 = scalar_lea.vmem %s6, 16
  %v345 = vld [vmem:[%s344] sm:$0xf]
  %v346 = vld [vmem:[%s344 + $0x4] sm:$0xf]
  %v347 = vld [vmem:[%s344 + $0x8] sm:$0xf]
  %v348 = vld [vmem:[%s344 + $0xc] sm:$0xf]
  %s349 = scalar_lea.vmem %s7, 1
  %v350 = vld [vmem:[%s349] sm:$0x1]
  %v352 = vperm.slane %v350, 0
  %v358 = vunpack.c.l.b16 %v345
  %v359 = vunpack.c.l.b16 %v346
  %v360 = vunpack.c.l.b16 %v347
  %v361 = vunpack.c.l.b16 %v348
  %v362 = vpack.c.b16 %v359, %v358
  %v363 = vpack.c.b16 %v361, %v360
  %366 = vmatpush.bf16.msra.mxu0 0
  %367 = vmatpush.bf16.msra.mxu0 0
  %368 = vmatpush.bf16.msra.mxu0 0
  %369 = vmatpush.bf16.msra.mxu0 0
  %370 = vmatpush.bf16.msra.mxu0 0
  %371 = vmatpush.bf16.msra.mxu0 0
  %372 = vmatpush.bf16.msra.mxu0 %v363
  %373 = vmatpush.bf16.msra.mxu0 %v362
  %374 = vmatmul.bf16.gmra.mxu0 %v161
  %v375 = vpop.f32.mrf.mxu0
  %v376 = vadd.f32 %v352, %v375
  %v377 = vpop.f32.mrf.mxu0
  %v378 = vadd.f32 %v352, %v377
  %379 = vdwg.mxu0
  %s380 = scalar_lea.vmem %s8, 16
  %v381 = vld [vmem:[%s380] sm:$0xf]
  %v382 = vld [vmem:[%s380 + $0x4] sm:$0xf]
  %v383 = vld [vmem:[%s380 + $0x8] sm:$0xf]
  %v384 = vld [vmem:[%s380 + $0xc] sm:$0xf]
  %s385 = scalar_lea.vmem %s9, 1
  %v386 = vld [vmem:[%s385] sm:$0x1]
  %v388 = vperm.slane %v386, 0
  %v394 = vunpack.c.l.b16 %v381
  %v395 = vunpack.c.l.b16 %v382
  %v396 = vunpack.c.l.b16 %v383
  %v397 = vunpack.c.l.b16 %v384
  %v398 = vpack.c.b16 %v395, %v394
  %v399 = vpack.c.b16 %v397, %v396
  %402 = vmatpush.bf16.msra.mxu0 0
  %403 = vmatpush.bf16.msra.mxu0 0
  %404 = vmatpush.bf16.msra.mxu0 0
  %405 = vmatpush.bf16.msra.mxu0 0
  %406 = vmatpush.bf16.msra.mxu0 0
  %407 = vmatpush.bf16.msra.mxu0 0
  %408 = vmatpush.bf16.msra.mxu0 %v399
  %409 = vmatpush.bf16.msra.mxu0 %v398
  %410 = vmatmul.bf16.gmra.mxu0 %v161
  %v411 = vpop.f32.mrf.mxu0
  %v412 = vadd.f32 %v388, %v411
  %v413 = vpop.f32.mrf.mxu0
  %v414 = vadd.f32 %v388, %v413
  %415 = vdwg.mxu0
  %v416 = vpack.c.bf16 %v342, %v340
  %v417 = vpack.c.bf16 %v378, %v376
  %v419 = vsel %vm247, %v416, 0
  %v422 = vsel %vm247, %v417, 0
  %424 = vmatpush.bf16.xpose.msra.mxu0 0
  %425 = vmatpush.bf16.xpose.msra.mxu0 0
  %426 = vmatpush.bf16.xpose.msra.mxu0 0
  %427 = vmatpush.bf16.xpose.msra.mxu0 0
  %428 = vmatpush.bf16.xpose.msra.mxu0 0
  %429 = vmatpush.bf16.xpose.msra.mxu0 0
  %430 = vmatpush.bf16.xpose.msra.mxu0 0
  %431 = vmatpush.bf16.xpose.msra.mxu0 %v422
  %432 = vmatmul.bf16.gmra.mxu0 %v419
  %v433 = vpop.f32.mrf.mxu0
  %v434 = vadd.f32 0.0, %v433
  %v435 = vpop.f32.mrf.mxu0
  %v436 = vadd.f32 0.0, %v435
  %437 = vdwg.mxu0
  %v438 = vmul.f32 %v434, 0.25
  %v439 = vmul.f32 %v436, 0.25
  %v440 = vadd.f32 %v438, %v137
  %v441 = vadd.f32 %v439, %v138
  %v442 = vmul.f32 %v440, 1.442695
  %v443 = vpow.pop %v442
  %v444 = vmul.f32 %v441, 1.442695
  %v445 = vpow.pop %v444
  %v446 = vsel %vm247, %v443, 0.0
  %447 = vadd.xlane.f32.xlu0 %v446
  %v448 = vpop.xlane.xlu0 %447
  %v449 = vsel %vm247, %v445, 0.0
  %450 = vadd.xlane.f32.xlu0 %v449
  %v451 = vpop.xlane.xlu0 %450
  %v452 = vrcp.pop %v448
  %v453 = vrcp.pop %v451
  %v454 = vmul.f32 %v443, %v452
  %v455 = vmul.f32 %v445, %v453
  %v456 = vpack.c.bf16 %v455, %v454
  %v457 = vpack.c.bf16 %v414, %v412
  %v459 = vsel %vm247, %v456, 0
  %461 = vmatpush.bf16.msra.mxu0 0
  %462 = vmatpush.bf16.msra.mxu0 0
  %463 = vmatpush.bf16.msra.mxu0 0
  %464 = vmatpush.bf16.msra.mxu0 0
  %465 = vmatpush.bf16.msra.mxu0 0
  %466 = vmatpush.bf16.msra.mxu0 0
  %467 = vmatpush.bf16.msra.mxu0 0
  %468 = vmatpush.bf16.msra.mxu0 %v457
  %469 = vmatmul.bf16.gmra.mxu0 %v459
  %v470 = vpop.f32.mrf.mxu0
  %v471 = vadd.f32 0.0, %v470
  %v472 = vpop.f32.mrf.mxu0
  %v473 = vadd.f32 0.0, %v472
  %474 = vdwg.mxu0
  %v475 = vpack.c.bf16 %v473, %v471
  %s476 = scalar_lea.vmem %s10, 8
  %v477 = vld [vmem:[%s476] sm:$0xf]
  %v478 = vld [vmem:[%s476 + $0x4] sm:$0xf]
  %v481 = vunpack.c.l.b16 %v477
  %v482 = vunpack.c.l.b16 %v478
  %v483 = vpack.c.b16 %v482, %v481
  %v486 = vsel %vm247, %v475, 0
  %488 = vmatpush.bf16.msra.mxu0 0
  %489 = vmatpush.bf16.msra.mxu0 0
  %490 = vmatpush.bf16.msra.mxu0 0
  %491 = vmatpush.bf16.msra.mxu0 0
  %492 = vmatpush.bf16.msra.mxu0 0
  %493 = vmatpush.bf16.msra.mxu0 0
  %494 = vmatpush.bf16.msra.mxu0 0
  %495 = vmatpush.bf16.msra.mxu0 %v483
  %496 = vmatmul.bf16.gmra.mxu0 %v486
  %v497 = vpop.f32.mrf.mxu0
  %v498 = vadd.f32 0.0, %v497
  %v499 = vpop.f32.mrf.mxu0
  %v500 = vadd.f32 0.0, %v499
  %501 = vdwg.mxu0
  %v504 = vunpack.c.l.b16 %v306
  %v505 = vunpack.c.l.b16 %v307
  %v506 = vpack.c.b16 %v505, %v504
  %v509 = vsel %vm247, %v305, 0
  %511 = vmatpush.bf16.msra.mxu0 0
  %512 = vmatpush.bf16.msra.mxu0 0
  %513 = vmatpush.bf16.msra.mxu0 0
  %514 = vmatpush.bf16.msra.mxu0 0
  %515 = vmatpush.bf16.msra.mxu0 0
  %516 = vmatpush.bf16.msra.mxu0 0
  %517 = vmatpush.bf16.msra.mxu0 0
  %518 = vmatpush.bf16.msra.mxu0 %v506
  %519 = vmatmul.bf16.gmra.mxu0 %v509
  %v520 = vpop.f32.mrf.mxu0
  %v521 = vadd.f32 %v498, %v520
  %v522 = vpop.f32.mrf.mxu0
  %v523 = vadd.f32 %v500, %v522
  %524 = vdwg.mxu0
  %v525 = vld [vmem:[%s11] sm:$0x1]
  %v527 = vperm.slane %v525, 0
  %v529 = vadd.f32 %v521, %v527
  %v530 = vadd.f32 %v523, %v527
  %v531 = vadd.f32 %v529, %v135
  %v532 = vadd.f32 %v530, %v136
  %v533 = vld [vmem:[%s12] sm:$0x1]
  %v534 = vld [vmem:[%s13] sm:$0x1]
  %v535 = vsel %vm76, %v531, 0.0
  %536 = vadd.xlane.f32.xlu0 %v535
  %v537 = vpop.xlane.xlu0 %536
  %v538 = vsel %vm76, %v532, 0.0
  %539 = vadd.xlane.f32.xlu0 %v538
  %v540 = vpop.xlane.xlu0 %539
  %v541 = vmul.f32 %v531, %v531
  %v542 = vmul.f32 %v532, %v532
  %v543 = vsel %vm76, %v541, 0.0
  %544 = vadd.xlane.f32.xlu0 %v543
  %v545 = vpop.xlane.xlu0 %544
  %v546 = vsel %vm76, %v542, 0.0
  %547 = vadd.xlane.f32.xlu0 %v546
  %v548 = vpop.xlane.xlu0 %547
  %v549 = vmul.f32 %v537, 0.03125
  %v550 = vmul.f32 %v540, 0.03125
  %v551 = vmul.f32 %v545, 0.03125
  %v552 = vmul.f32 %v548, 0.03125
  %v553 = vmul.f32 %v549, %v549
  %v554 = vmul.f32 %v550, %v550
  %v555 = vsub.f32 %v551, %v553
  %v556 = vsub.f32 %v552, %v554
  %v557 = vmax.f32 %v555, 0.0
  %v558 = vmax.f32 %v556, 0.0
  %v559 = vsub.f32 %v531, %v549
  %v560 = vsub.f32 %v532, %v550
  %v561 = vadd.f32 %v557, 1e-12
  %v562 = vadd.f32 %v558, 1e-12
  %v563 = vrsqrt.pop %v561
  %v564 = vmul.f32 %v563, %v561
  %v565 = vmul.f32 %v564, %v563
  %v566 = vmul.f32 0.5, %v565
  %v567 = vsub.f32 1.5, %v566
  %v568 = vmul.f32 %v563, %v567
  %vm569 = vweird.f32 %v561
  %vm570 = vweird.f32 %v563
  %vm571 = vmor %vm569, %vm570
  %v572 = vsel %vm571, %v563, %v568
  %v573 = vrsqrt.pop %v562
  %v574 = vmul.f32 %v573, %v562
  %v575 = vmul.f32 %v574, %v573
  %v576 = vmul.f32 0.5, %v575
  %v577 = vsub.f32 1.5, %v576
  %v578 = vmul.f32 %v573, %v577
  %vm579 = vweird.f32 %v562
  %vm580 = vweird.f32 %v573
  %vm581 = vmor %vm579, %vm580
  %v582 = vsel %vm581, %v573, %v578
  %v583 = vmul.f32 %v559, %v572
  %v584 = vmul.f32 %v560, %v582
  %v586 = vperm.slane %v533, 0
  %v588 = vmul.f32 %v583, %v586
  %v589 = vmul.f32 %v584, %v586
  %v591 = vperm.slane %v534, 0
  %v593 = vadd.f32 %v588, %v591
  %v594 = vadd.f32 %v589, %v591
  %v595 = vpack.c.bf16 %v594, %v593
  %v596 = vld [vmem:[%s14] sm:$0xf]
  %v597 = vld [vmem:[%s14 + $0x4] sm:$0xf]
  %v598 = vld [vmem:[%s14 + $0x8] sm:$0xf]
  %v599 = vld [vmem:[%s14 + $0xc] sm:$0xf]
  %v600 = vld [vmem:[%s15] sm:$0x1]
  %v602 = vperm.slane %v600, 0
  %v608 = vunpack.c.l.b16 %v596
  %v609 = vunpack.c.l.b16 %v597
  %v610 = vunpack.c.l.b16 %v598
  %v611 = vunpack.c.l.b16 %v599
  %v612 = vpack.c.b16 %v609, %v608
  %v613 = vpack.c.b16 %v611, %v610
  %v617 = vsel %vm76, %v595, 0
  %619 = vmatpush.bf16.msra.mxu0 0
  %620 = vmatpush.bf16.msra.mxu0 0
  %621 = vmatpush.bf16.msra.mxu0 0
  %622 = vmatpush.bf16.msra.mxu0 0
  %623 = vmatpush.bf16.msra.mxu0 0
  %624 = vmatpush.bf16.msra.mxu0 0
  %625 = vmatpush.bf16.msra.mxu0 %v613
  %626 = vmatpush.bf16.msra.mxu0 %v612
  %627 = vmatmul.bf16.gmra.mxu0 %v617
  %v628 = vpop.f32.mrf.mxu0
  %v629 = vadd.f32 %v602, %v628
  %v630 = vpop.f32.mrf.mxu0
  %v631 = vadd.f32 %v602, %v630
  %632 = vdwg.mxu0
  %v633 = vmul.f32 %v629, 0.5
  %v634 = vmul.f32 %v631, 0.5
  %v635 = vmul.f32 %v629, 0.70710677
  %v636 = vmul.f32 %v631, 0.70710677
  %v637 = vmul.f32 %v635, %v635
  %v638 = vmin.f32 16.0, %v637
  %v639 = vmul.f32 %v638, 2.1237322e-06
  %v640 = vadd.f32 %v639, 0.00028619796
  %v641 = vmul.f32 %v638, %v640
  %v642 = vadd.f32 %v641, 0.0036580483
  %v643 = vmul.f32 %v638, %v642
  %v644 = vadd.f32 %v643, 0.05243302
  %v645 = vmul.f32 %v638, %v644
  %v646 = vadd.f32 %v645, 0.18741608
  %v647 = vmul.f32 %v638, %v646
  %v648 = vadd.f32 %v647, 1.1283791
  %v649 = vmul.f32 %v635, %v648
  %v650 = vmul.f32 %v638, 3.8918573e-05
  %v651 = vadd.f32 %v650, 0.001143296
  %v652 = vmul.f32 %v638, %v651
  %v653 = vadd.f32 %v652, 0.014752088
  %v654 = vmul.f32 %v638, %v653
  %v655 = vadd.f32 %v654, 0.112945676
  %v656 = vmul.f32 %v638, %v655
  %v657 = vadd.f32 %v656, 0.4994258
  %v658 = vmul.f32 %v638, %v657
  %v659 = vadd.f32 %v658, 1.0
  %v660 = vrcp.pop %v659
  %v661 = vmul.f32 %v659, %v660
  %v662 = vsub.f32 1.0, %v661
  %v663 = vmul.f32 %v660, %v662
  %v664 = vadd.f32 %v660, %v663
  %vm665 = vweird.f32 %v659
  %vm666 = vweird.f32 %v660
  %vm667 = vmor %vm665, %vm666
  %v668 = vsel %vm667, %v660, %v664
  %v669 = vand.u32 2147483647, %v659
  %vm670 = vcmp.eq.f32.partialorder %v669, 8.507059e+37
  %v671 = vand.u32 %v659, 2147483648
  %v672 = vor.u32 1.1754944e-38, %v671
  %v673 = vsel %vm670, %v672, %v668
  %v674 = vmul.f32 %v649, %v673
  %v675 = vmin.f32 %v674, 1.0
  %v676 = vmax.f32 %v675, -1.0
  %v677 = vmul.f32 %v636, %v636
  %v678 = vmin.f32 16.0, %v677
  %v679 = vmul.f32 %v678, 2.1237322e-06
  %v680 = vadd.f32 %v679, 0.00028619796
  %v681 = vmul.f32 %v678, %v680
  %v682 = vadd.f32 %v681, 0.0036580483
  %v683 = vmul.f32 %v678, %v682
  %v684 = vadd.f32 %v683, 0.05243302
  %v685 = vmul.f32 %v678, %v684
  %v686 = vadd.f32 %v685, 0.18741608
  %v687 = vmul.f32 %v678, %v686
  %v688 = vadd.f32 %v687, 1.1283791
  %v689 = vmul.f32 %v636, %v688
  %v690 = vmul.f32 %v678, 3.8918573e-05
  %v691 = vadd.f32 %v690, 0.001143296
  %v692 = vmul.f32 %v678, %v691
  %v693 = vadd.f32 %v692, 0.014752088
  %v694 = vmul.f32 %v678, %v693
  %v695 = vadd.f32 %v694, 0.112945676
  %v696 = vmul.f32 %v678, %v695
  %v697 = vadd.f32 %v696, 0.4994258
  %v698 = vmul.f32 %v678, %v697
  %v699 = vadd.f32 %v698, 1.0
  %v700 = vrcp.pop %v699
  %v701 = vmul.f32 %v699, %v700
  %v702 = vsub.f32 1.0, %v701
  %v703 = vmul.f32 %v700, %v702
  %v704 = vadd.f32 %v700, %v703
  %vm705 = vweird.f32 %v699
  %vm706 = vweird.f32 %v700
  %vm707 = vmor %vm705, %vm706
  %v708 = vsel %vm707, %v700, %v704
  %v709 = vand.u32 2147483647, %v699
  %vm710 = vcmp.eq.f32.partialorder %v709, 8.507059e+37
  %v711 = vand.u32 %v699, 2147483648
  %v712 = vor.u32 1.1754944e-38, %v711
  %v713 = vsel %vm710, %v712, %v708
  %v714 = vmul.f32 %v689, %v713
  %v715 = vmin.f32 %v714, 1.0
  %v716 = vmax.f32 %v715, -1.0
  %v717 = vadd.f32 %v676, 1.0
  %v718 = vadd.f32 %v716, 1.0
  %v719 = vmul.f32 %v633, %v717
  %v720 = vmul.f32 %v634, %v718
  %v721 = vpack.c.bf16 %v720, %v719
  %v722 = vld [vmem:[%s16] sm:$0xf]
  %v723 = vld [vmem:[%s16 + $0x4] sm:$0xf]
  %v724 = vld [vmem:[%s16 + $0x8] sm:$0xf]
  %v725 = vld [vmem:[%s16 + $0xc] sm:$0xf]
  %v726 = vld [vmem:[%s16 + $0x10] sm:$0xf]
  %v727 = vld [vmem:[%s16 + $0x14] sm:$0xf]
  %v728 = vld [vmem:[%s16 + $0x18] sm:$0xf]
  %v729 = vld [vmem:[%s16 + $0x1c] sm:$0xf]
  %v730 = vld [vmem:[%s17] sm:$0x1]
  %v732 = vperm.slane %v730, 0
  %v742 = vunpack.c.l.b16 %v722
  %v743 = vunpack.c.l.b16 %v723
  %v744 = vunpack.c.l.b16 %v724
  %v745 = vunpack.c.l.b16 %v725
  %v746 = vunpack.c.l.b16 %v726
  %v747 = vunpack.c.l.b16 %v727
  %v748 = vunpack.c.l.b16 %v728
  %v749 = vunpack.c.l.b16 %v729
  %v750 = vpack.c.b16 %v743, %v742
  %v751 = vpack.c.b16 %v745, %v744
  %v752 = vpack.c.b16 %v747, %v746
  %v753 = vpack.c.b16 %v749, %v748
  %vm758 = vcmask 523264
  %v760 = vsel %vm758, %v721, 0
  %762 = vmatpush.bf16.msra.mxu0 0
  %763 = vmatpush.bf16.msra.mxu0 0
  %764 = vmatpush.bf16.msra.mxu0 0
  %765 = vmatpush.bf16.msra.mxu0 0
  %766 = vmatpush.bf16.msra.mxu0 %v753
  %767 = vmatpush.bf16.msra.mxu0 %v752
  %768 = vmatpush.bf16.msra.mxu0 %v751
  %769 = vmatpush.bf16.msra.mxu0 %v750
  %770 = vmatmul.bf16.gmra.mxu0 %v760
  %v771 = vpop.f32.mrf.mxu0
  %v772 = vadd.f32 %v732, %v771
  %v773 = vpop.f32.mrf.mxu0
  %v774 = vadd.f32 %v732, %v773
  %775 = vdwg.mxu0
  %v776 = vadd.f32 %v772, %v593
  %v777 = vadd.f32 %v774, %v594
  %v778 = vld [vmem:[%s18] sm:$0x1]
  %v779 = vld [vmem:[%s19] sm:$0x1]
  %v780 = vsel %vm76, %v776, 0.0
  %781 = vadd.xlane.f32.xlu0 %v780
  %v782 = vpop.xlane.xlu0 %781
  %v783 = vsel %vm76, %v777, 0.0
  %784 = vadd.xlane.f32.xlu0 %v783
  %v785 = vpop.xlane.xlu0 %784
  %v786 = vmul.f32 %v776, %v776
  %v787 = vmul.f32 %v777, %v777
  %v788 = vsel %vm76, %v786, 0.0
  %789 = vadd.xlane.f32.xlu0 %v788
  %v790 = vpop.xlane.xlu0 %789
  %v791 = vsel %vm76, %v787, 0.0
  %792 = vadd.xlane.f32.xlu0 %v791
  %v793 = vpop.xlane.xlu0 %792
  %v794 = vmul.f32 %v782, 0.03125
  %v795 = vmul.f32 %v785, 0.03125
  %v796 = vmul.f32 %v790, 0.03125
  %v797 = vmul.f32 %v793, 0.03125
  %v798 = vmul.f32 %v794, %v794
  %v799 = vmul.f32 %v795, %v795
  %v800 = vsub.f32 %v796, %v798
  %v801 = vsub.f32 %v797, %v799
  %v802 = vmax.f32 %v800, 0.0
  %v803 = vmax.f32 %v801, 0.0
  %v804 = vsub.f32 %v776, %v794
  %v805 = vsub.f32 %v777, %v795
  %v806 = vadd.f32 %v802, 1e-12
  %v807 = vadd.f32 %v803, 1e-12
  %v808 = vrsqrt.pop %v806
  %v809 = vmul.f32 %v808, %v806
  %v810 = vmul.f32 %v809, %v808
  %v811 = vmul.f32 0.5, %v810
  %v812 = vsub.f32 1.5, %v811
  %v813 = vmul.f32 %v808, %v812
  %vm814 = vweird.f32 %v806
  %vm815 = vweird.f32 %v808
  %vm816 = vmor %vm814, %vm815
  %v817 = vsel %vm816, %v808, %v813
  %v818 = vrsqrt.pop %v807
  %v819 = vmul.f32 %v818, %v807
  %v820 = vmul.f32 %v819, %v818
  %v821 = vmul.f32 0.5, %v820
  %v822 = vsub.f32 1.5, %v821
  %v823 = vmul.f32 %v818, %v822
  %vm824 = vweird.f32 %v807
  %vm825 = vweird.f32 %v818
  %vm826 = vmor %vm824, %vm825
  %v827 = vsel %vm826, %v818, %v823
  %v828 = vmul.f32 %v804, %v817
  %v829 = vmul.f32 %v805, %v827
  %v831 = vperm.slane %v778, 0
  %v833 = vmul.f32 %v828, %v831
  %v834 = vmul.f32 %v829, %v831
  %v836 = vperm.slane %v779, 0
  %v838 = vadd.f32 %v833, %v836
  %v839 = vadd.f32 %v834, %v836
  %v840 = vpack.c.bf16 %v839, %v838
  %s841 = scalar_lea.vmem %s4, 32
  %v842 = vld [vmem:[%s841] sm:$0xf]
  %v843 = vld [vmem:[%s841 + $0x4] sm:$0xf]
  %v844 = vld [vmem:[%s841 + $0x8] sm:$0xf]
  %v845 = vld [vmem:[%s841 + $0xc] sm:$0xf]
  %s846 = scalar_lea.vmem %s5, 2
  %v847 = vld [vmem:[%s846] sm:$0x1]
  %v849 = vperm.slane %v847, 0
  %v855 = vunpack.c.l.b16 %v842
  %v856 = vunpack.c.l.b16 %v843
  %v857 = vunpack.c.l.b16 %v844
  %v858 = vunpack.c.l.b16 %v845
  %v859 = vpack.c.b16 %v856, %v855
  %v860 = vpack.c.b16 %v858, %v857
  %v864 = vsel %vm76, %v840, 0
  %866 = vmatpush.bf16.msra.mxu0 0
  %867 = vmatpush.bf16.msra.mxu0 0
  %868 = vmatpush.bf16.msra.mxu0 0
  %869 = vmatpush.bf16.msra.mxu0 0
  %870 = vmatpush.bf16.msra.mxu0 0
  %871 = vmatpush.bf16.msra.mxu0 0
  %872 = vmatpush.bf16.msra.mxu0 %v860
  %873 = vmatpush.bf16.msra.mxu0 %v859
  %874 = vmatmul.bf16.gmra.mxu0 %v864
  %v875 = vpop.f32.mrf.mxu0
  %v876 = vadd.f32 %v849, %v875
  %v877 = vpop.f32.mrf.mxu0
  %v878 = vadd.f32 %v849, %v877
  %879 = vdwg.mxu0
  %s880 = scalar_lea.vmem %s6, 32
  %v881 = vld [vmem:[%s880] sm:$0xf]
  %v882 = vld [vmem:[%s880 + $0x4] sm:$0xf]
  %v883 = vld [vmem:[%s880 + $0x8] sm:$0xf]
  %v884 = vld [vmem:[%s880 + $0xc] sm:$0xf]
  %s885 = scalar_lea.vmem %s7, 2
  %v886 = vld [vmem:[%s885] sm:$0x1]
  %v888 = vperm.slane %v886, 0
  %v894 = vunpack.c.l.b16 %v881
  %v895 = vunpack.c.l.b16 %v882
  %v896 = vunpack.c.l.b16 %v883
  %v897 = vunpack.c.l.b16 %v884
  %v898 = vpack.c.b16 %v895, %v894
  %v899 = vpack.c.b16 %v897, %v896
  %902 = vmatpush.bf16.msra.mxu0 0
  %903 = vmatpush.bf16.msra.mxu0 0
  %904 = vmatpush.bf16.msra.mxu0 0
  %905 = vmatpush.bf16.msra.mxu0 0
  %906 = vmatpush.bf16.msra.mxu0 0
  %907 = vmatpush.bf16.msra.mxu0 0
  %908 = vmatpush.bf16.msra.mxu0 %v899
  %909 = vmatpush.bf16.msra.mxu0 %v898
  %910 = vmatmul.bf16.gmra.mxu0 %v864
  %v911 = vpop.f32.mrf.mxu0
  %v912 = vadd.f32 %v888, %v911
  %v913 = vpop.f32.mrf.mxu0
  %v914 = vadd.f32 %v888, %v913
  %915 = vdwg.mxu0
  %s916 = scalar_lea.vmem %s8, 32
  %v917 = vld [vmem:[%s916] sm:$0xf]
  %v918 = vld [vmem:[%s916 + $0x4] sm:$0xf]
  %v919 = vld [vmem:[%s916 + $0x8] sm:$0xf]
  %v920 = vld [vmem:[%s916 + $0xc] sm:$0xf]
  %s921 = scalar_lea.vmem %s9, 2
  %v922 = vld [vmem:[%s921] sm:$0x1]
  %v924 = vperm.slane %v922, 0
  %v930 = vunpack.c.l.b16 %v917
  %v931 = vunpack.c.l.b16 %v918
  %v932 = vunpack.c.l.b16 %v919
  %v933 = vunpack.c.l.b16 %v920
  %v934 = vpack.c.b16 %v931, %v930
  %v935 = vpack.c.b16 %v933, %v932
  %938 = vmatpush.bf16.msra.mxu0 0
  %939 = vmatpush.bf16.msra.mxu0 0
  %940 = vmatpush.bf16.msra.mxu0 0
  %941 = vmatpush.bf16.msra.mxu0 0
  %942 = vmatpush.bf16.msra.mxu0 0
  %943 = vmatpush.bf16.msra.mxu0 0
  %944 = vmatpush.bf16.msra.mxu0 %v935
  %945 = vmatpush.bf16.msra.mxu0 %v934
  %946 = vmatmul.bf16.gmra.mxu0 %v864
  %v947 = vpop.f32.mrf.mxu0
  %v948 = vadd.f32 %v924, %v947
  %v949 = vpop.f32.mrf.mxu0
  %v950 = vadd.f32 %v924, %v949
  %951 = vdwg.mxu0
  %v952 = vpack.c.bf16 %v878, %v876
  %v953 = vpack.c.bf16 %v914, %v912
  %v955 = vsel %vm247, %v952, 0
  %v958 = vsel %vm247, %v953, 0
  %960 = vmatpush.bf16.xpose.msra.mxu0 0
  %961 = vmatpush.bf16.xpose.msra.mxu0 0
  %962 = vmatpush.bf16.xpose.msra.mxu0 0
  %963 = vmatpush.bf16.xpose.msra.mxu0 0
  %964 = vmatpush.bf16.xpose.msra.mxu0 0
  %965 = vmatpush.bf16.xpose.msra.mxu0 0
  %966 = vmatpush.bf16.xpose.msra.mxu0 0
  %967 = vmatpush.bf16.xpose.msra.mxu0 %v958
  %968 = vmatmul.bf16.gmra.mxu0 %v955
  %v969 = vpop.f32.mrf.mxu0
  %v970 = vadd.f32 0.0, %v969
  %v971 = vpop.f32.mrf.mxu0
  %v972 = vadd.f32 0.0, %v971
  %973 = vdwg.mxu0
  %v974 = vmul.f32 %v970, 0.25
  %v975 = vmul.f32 %v972, 0.25
  %v976 = vadd.f32 %v974, %v137
  %v977 = vadd.f32 %v975, %v138
  %v978 = vmul.f32 %v976, 1.442695
  %v979 = vpow.pop %v978
  %v980 = vmul.f32 %v977, 1.442695
  %v981 = vpow.pop %v980
  %v982 = vsel %vm247, %v979, 0.0
  %983 = vadd.xlane.f32.xlu0 %v982
  %v984 = vpop.xlane.xlu0 %983
  %v985 = vsel %vm247, %v981, 0.0
  %986 = vadd.xlane.f32.xlu0 %v985
  %v987 = vpop.xlane.xlu0 %986
  %v988 = vrcp.pop %v984
  %v989 = vrcp.pop %v987
  %v990 = vmul.f32 %v979, %v988
  %v991 = vmul.f32 %v981, %v989
  %v992 = vpack.c.bf16 %v991, %v990
  %v993 = vpack.c.bf16 %v950, %v948
  %v995 = vsel %vm247, %v992, 0
  %997 = vmatpush.bf16.msra.mxu0 0
  %998 = vmatpush.bf16.msra.mxu0 0
  %999 = vmatpush.bf16.msra.mxu0 0
  %1000 = vmatpush.bf16.msra.mxu0 0
  %1001 = vmatpush.bf16.msra.mxu0 0
  %1002 = vmatpush.bf16.msra.mxu0 0
  %1003 = vmatpush.bf16.msra.mxu0 0
  %1004 = vmatpush.bf16.msra.mxu0 %v993
  %1005 = vmatmul.bf16.gmra.mxu0 %v995
  %v1006 = vpop.f32.mrf.mxu0
  %v1007 = vadd.f32 0.0, %v1006
  %v1008 = vpop.f32.mrf.mxu0
  %v1009 = vadd.f32 0.0, %v1008
  %1010 = vdwg.mxu0
  %v1011 = vpack.c.bf16 %v1009, %v1007
  %s1012 = scalar_lea.vmem %s10, 16
  %v1013 = vld [vmem:[%s1012] sm:$0xf]
  %v1014 = vld [vmem:[%s1012 + $0x4] sm:$0xf]
  %s1015 = scalar_lea.vmem %s4, 48
  %v1016 = vld [vmem:[%s1015] sm:$0xf]
  %v1017 = vld [vmem:[%s1015 + $0x4] sm:$0xf]
  %v1018 = vld [vmem:[%s1015 + $0x8] sm:$0xf]
  %v1019 = vld [vmem:[%s1015 + $0xc] sm:$0xf]
  %s1020 = scalar_lea.vmem %s5, 3
  %v1021 = vld [vmem:[%s1020] sm:$0x1]
  %v1023 = vperm.slane %v1021, 0
  %v1029 = vunpack.c.l.b16 %v1016
  %v1030 = vunpack.c.l.b16 %v1017
  %v1031 = vunpack.c.l.b16 %v1018
  %v1032 = vunpack.c.l.b16 %v1019
  %v1033 = vpack.c.b16 %v1030, %v1029
  %v1034 = vpack.c.b16 %v1032, %v1031
  %1037 = vmatpush.bf16.msra.mxu0 0
  %1038 = vmatpush.bf16.msra.mxu0 0
  %1039 = vmatpush.bf16.msra.mxu0 0
  %1040 = vmatpush.bf16.msra.mxu0 0
  %1041 = vmatpush.bf16.msra.mxu0 0
  %1042 = vmatpush.bf16.msra.mxu0 0
  %1043 = vmatpush.bf16.msra.mxu0 %v1034
  %1044 = vmatpush.bf16.msra.mxu0 %v1033
  %1045 = vmatmul.bf16.gmra.mxu0 %v864
  %v1046 = vpop.f32.mrf.mxu0
  %v1047 = vadd.f32 %v1023, %v1046
  %v1048 = vpop.f32.mrf.mxu0
  %v1049 = vadd.f32 %v1023, %v1048
  %1050 = vdwg.mxu0
  %s1051 = scalar_lea.vmem %s6, 48
  %v1052 = vld [vmem:[%s1051] sm:$0xf]
  %v1053 = vld [vmem:[%s1051 + $0x4] sm:$0xf]
  %v1054 = vld [vmem:[%s1051 + $0x8] sm:$0xf]
  %v1055 = vld [vmem:[%s1051 + $0xc] sm:$0xf]
  %s1056 = scalar_lea.vmem %s7, 3
  %v1057 = vld [vmem:[%s1056] sm:$0x1]
  %v1059 = vperm.slane %v1057, 0
  %v1065 = vunpack.c.l.b16 %v1052
  %v1066 = vunpack.c.l.b16 %v1053
  %v1067 = vunpack.c.l.b16 %v1054
  %v1068 = vunpack.c.l.b16 %v1055
  %v1069 = vpack.c.b16 %v1066, %v1065
  %v1070 = vpack.c.b16 %v1068, %v1067
  %1073 = vmatpush.bf16.msra.mxu0 0
  %1074 = vmatpush.bf16.msra.mxu0 0
  %1075 = vmatpush.bf16.msra.mxu0 0
  %1076 = vmatpush.bf16.msra.mxu0 0
  %1077 = vmatpush.bf16.msra.mxu0 0
  %1078 = vmatpush.bf16.msra.mxu0 0
  %1079 = vmatpush.bf16.msra.mxu0 %v1070
  %1080 = vmatpush.bf16.msra.mxu0 %v1069
  %1081 = vmatmul.bf16.gmra.mxu0 %v864
  %v1082 = vpop.f32.mrf.mxu0
  %v1083 = vadd.f32 %v1059, %v1082
  %v1084 = vpop.f32.mrf.mxu0
  %v1085 = vadd.f32 %v1059, %v1084
  %1086 = vdwg.mxu0
  %s1087 = scalar_lea.vmem %s8, 48
  %v1088 = vld [vmem:[%s1087] sm:$0xf]
  %v1089 = vld [vmem:[%s1087 + $0x4] sm:$0xf]
  %v1090 = vld [vmem:[%s1087 + $0x8] sm:$0xf]
  %v1091 = vld [vmem:[%s1087 + $0xc] sm:$0xf]
  %s1092 = scalar_lea.vmem %s9, 3
  %v1093 = vld [vmem:[%s1092] sm:$0x1]
  %v1095 = vperm.slane %v1093, 0
  %v1101 = vunpack.c.l.b16 %v1088
  %v1102 = vunpack.c.l.b16 %v1089
  %v1103 = vunpack.c.l.b16 %v1090
  %v1104 = vunpack.c.l.b16 %v1091
  %v1105 = vpack.c.b16 %v1102, %v1101
  %v1106 = vpack.c.b16 %v1104, %v1103
  %1109 = vmatpush.bf16.msra.mxu0 0
  %1110 = vmatpush.bf16.msra.mxu0 0
  %1111 = vmatpush.bf16.msra.mxu0 0
  %1112 = vmatpush.bf16.msra.mxu0 0
  %1113 = vmatpush.bf16.msra.mxu0 0
  %1114 = vmatpush.bf16.msra.mxu0 0
  %1115 = vmatpush.bf16.msra.mxu0 %v1106
  %1116 = vmatpush.bf16.msra.mxu0 %v1105
  %1117 = vmatmul.bf16.gmra.mxu0 %v864
  %v1118 = vpop.f32.mrf.mxu0
  %v1119 = vadd.f32 %v1095, %v1118
  %v1120 = vpop.f32.mrf.mxu0
  %v1121 = vadd.f32 %v1095, %v1120
  %1122 = vdwg.mxu0
  %v1123 = vpack.c.bf16 %v1049, %v1047
  %v1124 = vpack.c.bf16 %v1085, %v1083
  %v1126 = vsel %vm247, %v1123, 0
  %v1129 = vsel %vm247, %v1124, 0
  %1131 = vmatpush.bf16.xpose.msra.mxu0 0
  %1132 = vmatpush.bf16.xpose.msra.mxu0 0
  %1133 = vmatpush.bf16.xpose.msra.mxu0 0
  %1134 = vmatpush.bf16.xpose.msra.mxu0 0
  %1135 = vmatpush.bf16.xpose.msra.mxu0 0
  %1136 = vmatpush.bf16.xpose.msra.mxu0 0
  %1137 = vmatpush.bf16.xpose.msra.mxu0 0
  %1138 = vmatpush.bf16.xpose.msra.mxu0 %v1129
  %1139 = vmatmul.bf16.gmra.mxu0 %v1126
  %v1140 = vpop.f32.mrf.mxu0
  %v1141 = vadd.f32 0.0, %v1140
  %v1142 = vpop.f32.mrf.mxu0
  %v1143 = vadd.f32 0.0, %v1142
  %1144 = vdwg.mxu0
  %v1145 = vmul.f32 %v1141, 0.25
  %v1146 = vmul.f32 %v1143, 0.25
  %v1147 = vadd.f32 %v1145, %v137
  %v1148 = vadd.f32 %v1146, %v138
  %v1149 = vmul.f32 %v1147, 1.442695
  %v1150 = vpow.pop %v1149
  %v1151 = vmul.f32 %v1148, 1.442695
  %v1152 = vpow.pop %v1151
  %v1153 = vsel %vm247, %v1150, 0.0
  %1154 = vadd.xlane.f32.xlu0 %v1153
  %v1155 = vpop.xlane.xlu0 %1154
  %v1156 = vsel %vm247, %v1152, 0.0
  %1157 = vadd.xlane.f32.xlu0 %v1156
  %v1158 = vpop.xlane.xlu0 %1157
  %v1159 = vrcp.pop %v1155
  %v1160 = vrcp.pop %v1158
  %v1161 = vmul.f32 %v1150, %v1159
  %v1162 = vmul.f32 %v1152, %v1160
  %v1163 = vpack.c.bf16 %v1162, %v1161
  %v1164 = vpack.c.bf16 %v1121, %v1119
  %v1166 = vsel %vm247, %v1163, 0
  %1168 = vmatpush.bf16.msra.mxu0 0
  %1169 = vmatpush.bf16.msra.mxu0 0
  %1170 = vmatpush.bf16.msra.mxu0 0
  %1171 = vmatpush.bf16.msra.mxu0 0
  %1172 = vmatpush.bf16.msra.mxu0 0
  %1173 = vmatpush.bf16.msra.mxu0 0
  %1174 = vmatpush.bf16.msra.mxu0 0
  %1175 = vmatpush.bf16.msra.mxu0 %v1164
  %1176 = vmatmul.bf16.gmra.mxu0 %v1166
  %v1177 = vpop.f32.mrf.mxu0
  %v1178 = vadd.f32 0.0, %v1177
  %v1179 = vpop.f32.mrf.mxu0
  %v1180 = vadd.f32 0.0, %v1179
  %1181 = vdwg.mxu0
  %v1182 = vpack.c.bf16 %v1180, %v1178
  %s1183 = scalar_lea.vmem %s10, 24
  %v1184 = vld [vmem:[%s1183] sm:$0xf]
  %v1185 = vld [vmem:[%s1183 + $0x4] sm:$0xf]
  %v1188 = vunpack.c.l.b16 %v1184
  %v1189 = vunpack.c.l.b16 %v1185
  %v1190 = vpack.c.b16 %v1189, %v1188
  %v1193 = vsel %vm247, %v1182, 0
  %1195 = vmatpush.bf16.msra.mxu0 0
  %1196 = vmatpush.bf16.msra.mxu0 0
  %1197 = vmatpush.bf16.msra.mxu0 0
  %1198 = vmatpush.bf16.msra.mxu0 0
  %1199 = vmatpush.bf16.msra.mxu0 0
  %1200 = vmatpush.bf16.msra.mxu0 0
  %1201 = vmatpush.bf16.msra.mxu0 0
  %1202 = vmatpush.bf16.msra.mxu0 %v1190
  %1203 = vmatmul.bf16.gmra.mxu0 %v1193
  %v1204 = vpop.f32.mrf.mxu0
  %v1205 = vadd.f32 0.0, %v1204
  %v1206 = vpop.f32.mrf.mxu0
  %v1207 = vadd.f32 0.0, %v1206
  %1208 = vdwg.mxu0
  %v1211 = vunpack.c.l.b16 %v1013
  %v1212 = vunpack.c.l.b16 %v1014
  %v1213 = vpack.c.b16 %v1212, %v1211
  %v1216 = vsel %vm247, %v1011, 0
  %1218 = vmatpush.bf16.msra.mxu0 0
  %1219 = vmatpush.bf16.msra.mxu0 0
  %1220 = vmatpush.bf16.msra.mxu0 0
  %1221 = vmatpush.bf16.msra.mxu0 0
  %1222 = vmatpush.bf16.msra.mxu0 0
  %1223 = vmatpush.bf16.msra.mxu0 0
  %1224 = vmatpush.bf16.msra.mxu0 0
  %1225 = vmatpush.bf16.msra.mxu0 %v1213
  %1226 = vmatmul.bf16.gmra.mxu0 %v1216
  %v1227 = vpop.f32.mrf.mxu0
  %v1228 = vadd.f32 %v1205, %v1227
  %v1229 = vpop.f32.mrf.mxu0
  %v1230 = vadd.f32 %v1207, %v1229
  %1231 = vdwg.mxu0
  %s1232 = scalar_lea.vmem %s11, 1
  %v1233 = vld [vmem:[%s1232] sm:$0x1]
  %v1235 = vperm.slane %v1233, 0
  %v1237 = vadd.f32 %v1228, %v1235
  %v1238 = vadd.f32 %v1230, %v1235
  %v1239 = vadd.f32 %v1237, %v838
  %v1240 = vadd.f32 %v1238, %v839
  %s1241 = scalar_lea.vmem %s12, 1
  %v1242 = vld [vmem:[%s1241] sm:$0x1]
  %s1243 = scalar_lea.vmem %s13, 1
  %v1244 = vld [vmem:[%s1243] sm:$0x1]
  %v1245 = vsel %vm76, %v1239, 0.0
  %1246 = vadd.xlane.f32.xlu0 %v1245
  %v1247 = vpop.xlane.xlu0 %1246
  %v1248 = vsel %vm76, %v1240, 0.0
  %1249 = vadd.xlane.f32.xlu0 %v1248
  %v1250 = vpop.xlane.xlu0 %1249
  %v1251 = vmul.f32 %v1239, %v1239
  %v1252 = vmul.f32 %v1240, %v1240
  %v1253 = vsel %vm76, %v1251, 0.0
  %1254 = vadd.xlane.f32.xlu0 %v1253
  %v1255 = vpop.xlane.xlu0 %1254
  %v1256 = vsel %vm76, %v1252, 0.0
  %1257 = vadd.xlane.f32.xlu0 %v1256
  %v1258 = vpop.xlane.xlu0 %1257
  %v1259 = vmul.f32 %v1247, 0.03125
  %v1260 = vmul.f32 %v1250, 0.03125
  %v1261 = vmul.f32 %v1255, 0.03125
  %v1262 = vmul.f32 %v1258, 0.03125
  %v1263 = vmul.f32 %v1259, %v1259
  %v1264 = vmul.f32 %v1260, %v1260
  %v1265 = vsub.f32 %v1261, %v1263
  %v1266 = vsub.f32 %v1262, %v1264
  %v1267 = vmax.f32 %v1265, 0.0
  %v1268 = vmax.f32 %v1266, 0.0
  %v1269 = vsub.f32 %v1239, %v1259
  %v1270 = vsub.f32 %v1240, %v1260
  %v1271 = vadd.f32 %v1267, 1e-12
  %v1272 = vadd.f32 %v1268, 1e-12
  %v1273 = vrsqrt.pop %v1271
  %v1274 = vmul.f32 %v1273, %v1271
  %v1275 = vmul.f32 %v1274, %v1273
  %v1276 = vmul.f32 0.5, %v1275
  %v1277 = vsub.f32 1.5, %v1276
  %v1278 = vmul.f32 %v1273, %v1277
  %vm1279 = vweird.f32 %v1271
  %vm1280 = vweird.f32 %v1273
  %vm1281 = vmor %vm1279, %vm1280
  %v1282 = vsel %vm1281, %v1273, %v1278
  %v1283 = vrsqrt.pop %v1272
  %v1284 = vmul.f32 %v1283, %v1272
  %v1285 = vmul.f32 %v1284, %v1283
  %v1286 = vmul.f32 0.5, %v1285
  %v1287 = vsub.f32 1.5, %v1286
  %v1288 = vmul.f32 %v1283, %v1287
  %vm1289 = vweird.f32 %v1272
  %vm1290 = vweird.f32 %v1283
  %vm1291 = vmor %vm1289, %vm1290
  %v1292 = vsel %vm1291, %v1283, %v1288
  %v1293 = vmul.f32 %v1269, %v1282
  %v1294 = vmul.f32 %v1270, %v1292
  %v1296 = vperm.slane %v1242, 0
  %v1298 = vmul.f32 %v1293, %v1296
  %v1299 = vmul.f32 %v1294, %v1296
  %v1301 = vperm.slane %v1244, 0
  %v1303 = vadd.f32 %v1298, %v1301
  %v1304 = vadd.f32 %v1299, %v1301
  %v1305 = vpack.c.bf16 %v1304, %v1303
  %s1306 = scalar_lea.vmem %s14, 16
  %v1307 = vld [vmem:[%s1306] sm:$0xf]
  %v1308 = vld [vmem:[%s1306 + $0x4] sm:$0xf]
  %v1309 = vld [vmem:[%s1306 + $0x8] sm:$0xf]
  %v1310 = vld [vmem:[%s1306 + $0xc] sm:$0xf]
  %s1311 = scalar_lea.vmem %s15, 1
  %v1312 = vld [vmem:[%s1311] sm:$0x1]
  %v1314 = vperm.slane %v1312, 0
  %v1320 = vunpack.c.l.b16 %v1307
  %v1321 = vunpack.c.l.b16 %v1308
  %v1322 = vunpack.c.l.b16 %v1309
  %v1323 = vunpack.c.l.b16 %v1310
  %v1324 = vpack.c.b16 %v1321, %v1320
  %v1325 = vpack.c.b16 %v1323, %v1322
  %v1329 = vsel %vm76, %v1305, 0
  %1331 = vmatpush.bf16.msra.mxu0 0
  %1332 = vmatpush.bf16.msra.mxu0 0
  %1333 = vmatpush.bf16.msra.mxu0 0
  %1334 = vmatpush.bf16.msra.mxu0 0
  %1335 = vmatpush.bf16.msra.mxu0 0
  %1336 = vmatpush.bf16.msra.mxu0 0
  %1337 = vmatpush.bf16.msra.mxu0 %v1325
  %1338 = vmatpush.bf16.msra.mxu0 %v1324
  %1339 = vmatmul.bf16.gmra.mxu0 %v1329
  %v1340 = vpop.f32.mrf.mxu0
  %v1341 = vadd.f32 %v1314, %v1340
  %v1342 = vpop.f32.mrf.mxu0
  %v1343 = vadd.f32 %v1314, %v1342
  %1344 = vdwg.mxu0
  %v1345 = vmul.f32 %v1341, 0.5
  %v1346 = vmul.f32 %v1343, 0.5
  %v1347 = vmul.f32 %v1341, 0.70710677
  %v1348 = vmul.f32 %v1343, 0.70710677
  %v1349 = vmul.f32 %v1347, %v1347
  %v1350 = vmin.f32 16.0, %v1349
  %v1351 = vmul.f32 %v1350, 2.1237322e-06
  %v1352 = vadd.f32 %v1351, 0.00028619796
  %v1353 = vmul.f32 %v1350, %v1352
  %v1354 = vadd.f32 %v1353, 0.0036580483
  %v1355 = vmul.f32 %v1350, %v1354
  %v1356 = vadd.f32 %v1355, 0.05243302
  %v1357 = vmul.f32 %v1350, %v1356
  %v1358 = vadd.f32 %v1357, 0.18741608
  %v1359 = vmul.f32 %v1350, %v1358
  %v1360 = vadd.f32 %v1359, 1.1283791
  %v1361 = vmul.f32 %v1347, %v1360
  %v1362 = vmul.f32 %v1350, 3.8918573e-05
  %v1363 = vadd.f32 %v1362, 0.001143296
  %v1364 = vmul.f32 %v1350, %v1363
  %v1365 = vadd.f32 %v1364, 0.014752088
  %v1366 = vmul.f32 %v1350, %v1365
  %v1367 = vadd.f32 %v1366, 0.112945676
  %v1368 = vmul.f32 %v1350, %v1367
  %v1369 = vadd.f32 %v1368, 0.4994258
  %v1370 = vmul.f32 %v1350, %v1369
  %v1371 = vadd.f32 %v1370, 1.0
  %v1372 = vrcp.pop %v1371
  %v1373 = vmul.f32 %v1371, %v1372
  %v1374 = vsub.f32 1.0, %v1373
  %v1375 = vmul.f32 %v1372, %v1374
  %v1376 = vadd.f32 %v1372, %v1375
  %vm1377 = vweird.f32 %v1371
  %vm1378 = vweird.f32 %v1372
  %vm1379 = vmor %vm1377, %vm1378
  %v1380 = vsel %vm1379, %v1372, %v1376
  %v1381 = vand.u32 2147483647, %v1371
  %vm1382 = vcmp.eq.f32.partialorder %v1381, 8.507059e+37
  %v1383 = vand.u32 %v1371, 2147483648
  %v1384 = vor.u32 1.1754944e-38, %v1383
  %v1385 = vsel %vm1382, %v1384, %v1380
  %v1386 = vmul.f32 %v1361, %v1385
  %v1387 = vmin.f32 %v1386, 1.0
  %v1388 = vmax.f32 %v1387, -1.0
  %v1389 = vmul.f32 %v1348, %v1348
  %v1390 = vmin.f32 16.0, %v1389
  %v1391 = vmul.f32 %v1390, 2.1237322e-06
  %v1392 = vadd.f32 %v1391, 0.00028619796
  %v1393 = vmul.f32 %v1390, %v1392
  %v1394 = vadd.f32 %v1393, 0.0036580483
  %v1395 = vmul.f32 %v1390, %v1394
  %v1396 = vadd.f32 %v1395, 0.05243302
  %v1397 = vmul.f32 %v1390, %v1396
  %v1398 = vadd.f32 %v1397, 0.18741608
  %v1399 = vmul.f32 %v1390, %v1398
  %v1400 = vadd.f32 %v1399, 1.1283791
  %v1401 = vmul.f32 %v1348, %v1400
  %v1402 = vmul.f32 %v1390, 3.8918573e-05
  %v1403 = vadd.f32 %v1402, 0.001143296
  %v1404 = vmul.f32 %v1390, %v1403
  %v1405 = vadd.f32 %v1404, 0.014752088
  %v1406 = vmul.f32 %v1390, %v1405
  %v1407 = vadd.f32 %v1406, 0.112945676
  %v1408 = vmul.f32 %v1390, %v1407
  %v1409 = vadd.f32 %v1408, 0.4994258
  %v1410 = vmul.f32 %v1390, %v1409
  %v1411 = vadd.f32 %v1410, 1.0
  %v1412 = vrcp.pop %v1411
  %v1413 = vmul.f32 %v1411, %v1412
  %v1414 = vsub.f32 1.0, %v1413
  %v1415 = vmul.f32 %v1412, %v1414
  %v1416 = vadd.f32 %v1412, %v1415
  %vm1417 = vweird.f32 %v1411
  %vm1418 = vweird.f32 %v1412
  %vm1419 = vmor %vm1417, %vm1418
  %v1420 = vsel %vm1419, %v1412, %v1416
  %v1421 = vand.u32 2147483647, %v1411
  %vm1422 = vcmp.eq.f32.partialorder %v1421, 8.507059e+37
  %v1423 = vand.u32 %v1411, 2147483648
  %v1424 = vor.u32 1.1754944e-38, %v1423
  %v1425 = vsel %vm1422, %v1424, %v1420
  %v1426 = vmul.f32 %v1401, %v1425
  %v1427 = vmin.f32 %v1426, 1.0
  %v1428 = vmax.f32 %v1427, -1.0
  %v1429 = vadd.f32 %v1388, 1.0
  %v1430 = vadd.f32 %v1428, 1.0
  %v1431 = vmul.f32 %v1345, %v1429
  %v1432 = vmul.f32 %v1346, %v1430
  %v1433 = vpack.c.bf16 %v1432, %v1431
  %s1434 = scalar_lea.vmem %s16, 32
  %v1435 = vld [vmem:[%s1434] sm:$0xf]
  %v1436 = vld [vmem:[%s1434 + $0x4] sm:$0xf]
  %v1437 = vld [vmem:[%s1434 + $0x8] sm:$0xf]
  %v1438 = vld [vmem:[%s1434 + $0xc] sm:$0xf]
  %v1439 = vld [vmem:[%s1434 + $0x10] sm:$0xf]
  %v1440 = vld [vmem:[%s1434 + $0x14] sm:$0xf]
  %v1441 = vld [vmem:[%s1434 + $0x18] sm:$0xf]
  %v1442 = vld [vmem:[%s1434 + $0x1c] sm:$0xf]
  %s1443 = scalar_lea.vmem %s17, 1
  %v1444 = vld [vmem:[%s1443] sm:$0x1]
  %v1446 = vperm.slane %v1444, 0
  %v1456 = vunpack.c.l.b16 %v1435
  %v1457 = vunpack.c.l.b16 %v1436
  %v1458 = vunpack.c.l.b16 %v1437
  %v1459 = vunpack.c.l.b16 %v1438
  %v1460 = vunpack.c.l.b16 %v1439
  %v1461 = vunpack.c.l.b16 %v1440
  %v1462 = vunpack.c.l.b16 %v1441
  %v1463 = vunpack.c.l.b16 %v1442
  %v1464 = vpack.c.b16 %v1457, %v1456
  %v1465 = vpack.c.b16 %v1459, %v1458
  %v1466 = vpack.c.b16 %v1461, %v1460
  %v1467 = vpack.c.b16 %v1463, %v1462
  %v1473 = vsel %vm758, %v1433, 0
  %1475 = vmatpush.bf16.msra.mxu0 0
  %1476 = vmatpush.bf16.msra.mxu0 0
  %1477 = vmatpush.bf16.msra.mxu0 0
  %1478 = vmatpush.bf16.msra.mxu0 0
  %1479 = vmatpush.bf16.msra.mxu0 %v1467
  %1480 = vmatpush.bf16.msra.mxu0 %v1466
  %1481 = vmatpush.bf16.msra.mxu0 %v1465
  %1482 = vmatpush.bf16.msra.mxu0 %v1464
  %1483 = vmatmul.bf16.gmra.mxu0 %v1473
  %v1484 = vpop.f32.mrf.mxu0
  %v1485 = vadd.f32 %v1446, %v1484
  %v1486 = vpop.f32.mrf.mxu0
  %v1487 = vadd.f32 %v1446, %v1486
  %1488 = vdwg.mxu0
  %v1489 = vadd.f32 %v1485, %v1303
  %v1490 = vadd.f32 %v1487, %v1304
  %s1491 = scalar_lea.vmem %s18, 1
  %v1492 = vld [vmem:[%s1491] sm:$0x1]
  %s1493 = scalar_lea.vmem %s19, 1
  %v1494 = vld [vmem:[%s1493] sm:$0x1]
  %v1495 = vsel %vm76, %v1489, 0.0
  %1496 = vadd.xlane.f32.xlu0 %v1495
  %v1497 = vpop.xlane.xlu0 %1496
  %v1498 = vsel %vm76, %v1490, 0.0
  %1499 = vadd.xlane.f32.xlu0 %v1498
  %v1500 = vpop.xlane.xlu0 %1499
  %v1501 = vmul.f32 %v1489, %v1489
  %v1502 = vmul.f32 %v1490, %v1490
  %v1503 = vsel %vm76, %v1501, 0.0
  %1504 = vadd.xlane.f32.xlu0 %v1503
  %v1505 = vpop.xlane.xlu0 %1504
  %v1506 = vsel %vm76, %v1502, 0.0
  %1507 = vadd.xlane.f32.xlu0 %v1506
  %v1508 = vpop.xlane.xlu0 %1507
  %v1509 = vmul.f32 %v1497, 0.03125
  %v1510 = vmul.f32 %v1500, 0.03125
  %v1511 = vmul.f32 %v1505, 0.03125
  %v1512 = vmul.f32 %v1508, 0.03125
  %v1513 = vmul.f32 %v1509, %v1509
  %v1514 = vmul.f32 %v1510, %v1510
  %v1515 = vsub.f32 %v1511, %v1513
  %v1516 = vsub.f32 %v1512, %v1514
  %v1517 = vmax.f32 %v1515, 0.0
  %v1518 = vmax.f32 %v1516, 0.0
  %v1519 = vsub.f32 %v1489, %v1509
  %v1520 = vsub.f32 %v1490, %v1510
  %v1521 = vadd.f32 %v1517, 1e-12
  %v1522 = vadd.f32 %v1518, 1e-12
  %v1523 = vrsqrt.pop %v1521
  %v1524 = vmul.f32 %v1523, %v1521
  %v1525 = vmul.f32 %v1524, %v1523
  %v1526 = vmul.f32 0.5, %v1525
  %v1527 = vsub.f32 1.5, %v1526
  %v1528 = vmul.f32 %v1523, %v1527
  %vm1529 = vweird.f32 %v1521
  %vm1530 = vweird.f32 %v1523
  %vm1531 = vmor %vm1529, %vm1530
  %v1532 = vsel %vm1531, %v1523, %v1528
  %v1533 = vrsqrt.pop %v1522
  %v1534 = vmul.f32 %v1533, %v1522
  %v1535 = vmul.f32 %v1534, %v1533
  %v1536 = vmul.f32 0.5, %v1535
  %v1537 = vsub.f32 1.5, %v1536
  %v1538 = vmul.f32 %v1533, %v1537
  %vm1539 = vweird.f32 %v1522
  %vm1540 = vweird.f32 %v1533
  %vm1541 = vmor %vm1539, %vm1540
  %v1542 = vsel %vm1541, %v1533, %v1538
  %v1543 = vmul.f32 %v1519, %v1532
  %v1544 = vmul.f32 %v1520, %v1542
  %v1546 = vperm.slane %v1492, 0
  %v1548 = vmul.f32 %v1543, %v1546
  %v1549 = vmul.f32 %v1544, %v1546
  %v1551 = vperm.slane %v1494, 0
  %v1553 = vadd.f32 %v1548, %v1551
  %v1554 = vadd.f32 %v1549, %v1551
  %v1555 = vpack.c.bf16 %v1554, %v1553
  %v1556 = vld [vmem:[%s20] sm:$0xf]
  %v1557 = vld [vmem:[%s20 + $0x4] sm:$0xf]
  %v1558 = vld [vmem:[%s20 + $0x8] sm:$0xf]
  %v1559 = vld [vmem:[%s20 + $0xc] sm:$0xf]
  %v1560 = vld [vmem:[%s21] sm:$0x1]
  %v1562 = vperm.slane %v1560, 0
  %v1568 = vunpack.c.l.b16 %v1556
  %v1569 = vunpack.c.l.b16 %v1557
  %v1570 = vunpack.c.l.b16 %v1558
  %v1571 = vunpack.c.l.b16 %v1559
  %v1572 = vpack.c.b16 %v1569, %v1568
  %v1573 = vpack.c.b16 %v1571, %v1570
  %v1577 = vsel %vm76, %v1555, 0
  %1579 = vmatpush.bf16.msra.mxu0 0
  %1580 = vmatpush.bf16.msra.mxu0 0
  %1581 = vmatpush.bf16.msra.mxu0 0
  %1582 = vmatpush.bf16.msra.mxu0 0
  %1583 = vmatpush.bf16.msra.mxu0 0
  %1584 = vmatpush.bf16.msra.mxu0 0
  %1585 = vmatpush.bf16.msra.mxu0 %v1573
  %1586 = vmatpush.bf16.msra.mxu0 %v1572
  %1587 = vmatmul.bf16.gmra.mxu0 %v1577
  %v1588 = vpop.f32.mrf.mxu0
  %v1589 = vadd.f32 %v1562, %v1588
  %v1590 = vpop.f32.mrf.mxu0
  %v1591 = vadd.f32 %v1562, %v1590
  %1592 = vdwg.mxu0
  %1593 = vst [vmem:[%s22] sm:$0xff] %v1589
  %1594 = vst [vmem:[%s22 + $0x8] sm:$0xff] %v1591
  // Predicated region
  $region90: #{bert_segmenter_forward.1} parent=0 // pred_check
    _
  $region91: #{bert_segmenter_forward.1} parent=0 // pred_check_branch
    %1596 = sbr.rel (0) target = $region93
  $region92: #{bert_segmenter_forward.1} parent=0 // pred_region
    _
  $region93: #{bert_segmenter_forward.1} parent=0 // pred_fallthru
    _
  // Predicated region
  $region94: #{bert_segmenter_forward.1} parent=0 // pred_check
    _
  $region95: #{bert_segmenter_forward.1} parent=0 // pred_check_branch
    %1598 = sbr.rel (0) target = $region97
  $region96: #{bert_segmenter_forward.1} parent=0 // pred_region
    _
  $region97: #{bert_segmenter_forward.1} parent=0 // pred_fallthru
    _

</llo_original>
